<compile_context>
chip_gen: v7x
topology: tpu7x:2x2x1
jax: 0.10.0
libtpu: 0.0.40
codegen_flags: <defaults>
</compile_context>

<pallas_src>
import math

import jax
import jax.numpy as jnp
from jax import lax
from jax.experimental import pallas as pl
from jax.experimental.pallas import tpu as pltpu

# ----------------------- config (small, GPT2-like) --------------------------
BATCH = 2
SEQ = 8
HIDDEN = 32
N_HEAD = 4
HEAD_DIM = HIDDEN // N_HEAD
LN_EPS = 1e-5
NEG_BIAS = -1e9  # finite "minus infinity" for masked logits (NaN-safe here)


def _layernorm(x, gamma, beta, eps):
    # biased variance, matching torch.nn.LayerNorm
    mean = jnp.mean(x, axis=-1, keepdims=True)
    var = jnp.mean((x - mean) ** 2, axis=-1, keepdims=True)
    inv = lax.rsqrt(var + eps)
    return (x - mean) * inv * gamma + beta


def gpt2_block_kernel(
    x_ref,       # (1, S, H)   one batch element's tokens
    wqkv_ref,    # (H, 3H)     c_attn weight (natural layout)
    wproj_ref,   # (H, H)      c_proj weight
    par_ref,     # (8, H)      rows: ln1_g, ln1_b, ln2_g, ln2_b, b_proj, b_q, b_k, b_v
    o_ref,       # (1, S, H)
    merged_ref,  # (S, H) f32  VMEM scratch: merged per-head attention output
):
    S = x_ref.shape[1]
    H = HIDDEN
    D = HEAD_DIM

    x = x_ref[0].astype(jnp.float32)               # (S, H)
    residual = x

    g1, b1 = par_ref[0:1, :], par_ref[1:2, :]
    g2, b2 = par_ref[2:3, :], par_ref[3:4, :]
    bproj = par_ref[4:5, :]
    bq, bk, bv = par_ref[5:6, :], par_ref[6:7, :], par_ref[7:8, :]

    # ---- ln_1 ----
    h = _layernorm(x, g1, b1, LN_EPS)               # (S, H)

    # ---- c_attn: single lane-dense matmul ----
    qkv = jnp.dot(h, wqkv_ref[...],
                  preferred_element_type=jnp.float32)          # (S, 3H)
    q_all = (qkv[:, 0:H] + bq) * (1.0 / math.sqrt(D))          # (S, H)
    k_all = qkv[:, H:2 * H] + bk                               # (S, H)
    v_all = qkv[:, 2 * H:3 * H] + bv                           # (S, H)

    # ---- causal additive bias, built in-kernel (no mask operand / DMA) ----
    qi = lax.broadcasted_iota(jnp.int32, (S, S), 0)
    ki = lax.broadcasted_iota(jnp.int32, (S, S), 1)
    bias = jnp.where(ki <= qi, 0.0, NEG_BIAS).astype(jnp.float32)   # (S, S)

    # ---- per-head attention; merge heads into a (S, H) scratch ----
    for hd in range(N_HEAD):
        sl = slice(hd * D, (hd + 1) * D)
        qh, kh, vh = q_all[:, sl], k_all[:, sl], v_all[:, sl]  # (S, D)
        scores = lax.dot_general(qh, kh, (((1,), (1,)), ((), ())),
                                 preferred_element_type=jnp.float32)  # (S, S)
        scores = scores + bias
        m = jnp.max(scores, axis=-1, keepdims=True)
        p = jnp.exp(scores - m)
        denom = jnp.sum(p, axis=-1, keepdims=True)             # >= 1 (diag kept)
        oh = jnp.dot(p, vh, preferred_element_type=jnp.float32) / denom  # (S, D)
        merged_ref[:, sl] = oh                                  # width-8 lane slice

    # ---- c_proj: single lane-dense matmul over the merged heads ----
    attn = jnp.dot(merged_ref[...], wproj_ref[...],
                   preferred_element_type=jnp.float32) + bproj  # (S, H)

    # ---- residual add + ln_2 ----
    out = _layernorm(attn + residual, g2, b2, LN_EPS)
    o_ref[0] = out.astype(o_ref.dtype)


def _pack_params(params):
    """Pack all tiny per-channel vectors into ONE (8, H) tile-sized operand."""
    H = HIDDEN
    b_qkv = params["b_qkv"]
    bq, bk, bv = b_qkv[:H], b_qkv[H:2 * H], b_qkv[2 * H:]
    return jnp.stack(
        [params["ln1_g"], params["ln1_b"], params["ln2_g"], params["ln2_b"],
         params["b_proj"], bq, bk, bv],
        axis=0,
    ).astype(jnp.float32)                                        # (8, H)


@jax.jit
def tiny_gpt2_block(x, params):
    """x: (B, S, H) float32. params: dict of weights."""
    B, S, H = x.shape
    assert (B, S, H) == (BATCH, SEQ, HIDDEN)

    packed = _pack_params(params)

    return pl.pallas_call(
        gpt2_block_kernel,
        out_shape=jax.ShapeDtypeStruct((B, S, H), x.dtype),
        grid=(B,),
        in_specs=[
            pl.BlockSpec((1, S, H), lambda b: (b, 0, 0)),
            pl.BlockSpec((H, 3 * H), lambda b: (0, 0)),   # grid-invariant
            pl.BlockSpec((H, H), lambda b: (0, 0)),       # grid-invariant
            pl.BlockSpec((8, H), lambda b: (0, 0)),       # grid-invariant
        ],
        out_specs=pl.BlockSpec((1, S, H), lambda b: (b, 0, 0)),
        scratch_shapes=[pltpu.VMEM((S, H), jnp.float32)],
        compiler_params=pltpu.CompilerParams(
            dimension_semantics=("parallel",)),           # v7x: one batch per TC
    )(x, params["w_qkv"], params["w_proj"], packed)


def _init_params(key):
    ks = jax.random.split(key, 8)
    std = 0.02
    return {
        "w_qkv": (std * jax.random.normal(ks[0], (HIDDEN, 3 * HIDDEN))).astype(jnp.float32),
        "b_qkv": (std * jax.random.normal(ks[1], (3 * HIDDEN,))).astype(jnp.float32),
        "w_proj": (std * jax.random.normal(ks[2], (HIDDEN, HIDDEN))).astype(jnp.float32),
        "b_proj": (std * jax.random.normal(ks[3], (HIDDEN,))).astype(jnp.float32),
        "ln1_g": (1.0 + 0.1 * jax.random.normal(ks[4], (HIDDEN,))).astype(jnp.float32),
        "ln1_b": (0.1 * jax.random.normal(ks[5], (HIDDEN,))).astype(jnp.float32),
        "ln2_g": (1.0 + 0.1 * jax.random.normal(ks[6], (HIDDEN,))).astype(jnp.float32),
        "ln2_b": (0.1 * jax.random.normal(ks[7], (HIDDEN,))).astype(jnp.float32),
    }


def _reference(x, p):
    """Pure-JAX f32 reference of the same forward (for sanity check)."""
    def ln(t, g, b):
        mu = jnp.mean(t, -1, keepdims=True)
        var = jnp.mean((t - mu) ** 2, -1, keepdims=True)
        return (t - mu) / jnp.sqrt(var + LN_EPS) * g + b

    res = x
    h = ln(x, p["ln1_g"], p["ln1_b"])
    qkv = h @ p["w_qkv"] + p["b_qkv"]
    q, k, v = jnp.split(qkv, 3, axis=-1)
    B, S, H = x.shape

    def split_heads(t):
        return t.reshape(B, S, N_HEAD, HEAD_DIM).transpose(0, 2, 1, 3)

    q, k, v = split_heads(q), split_heads(k), split_heads(v)
    scores = jnp.einsum("bhqd,bhkd->bhqk", q, k) / math.sqrt(HEAD_DIM)
    causal = jnp.tril(jnp.ones((S, S), bool))
    scores = jnp.where(causal, scores, jnp.finfo(jnp.float32).min)
    probs = jax.nn.softmax(scores, axis=-1)
    attn = jnp.einsum("bhqk,bhkd->bhqd", probs, v)
    attn = attn.transpose(0, 2, 1, 3).reshape(B, S, H)
    attn = attn @ p["w_proj"] + p["b_proj"]
    return ln(attn + res, p["ln2_g"], p["ln2_b"])


if __name__ == "__main__":
    key = jax.random.PRNGKey(0)
    kx, kp = jax.random.split(key)
    x = jax.random.normal(kx, (BATCH, SEQ, HIDDEN), jnp.float32)
    params = _init_params(kp)

    out = jax.block_until_ready(tiny_gpt2_block(x, params))
    ref = _reference(x, params)

    assert out.shape == (BATCH, SEQ, HIDDEN)
    max_err = float(jnp.max(jnp.abs(out - ref)))
    assert jnp.allclose(out, ref, atol=1e-4, rtol=1e-4), (
        f"mismatch vs reference (max abs err {max_err})")

    print("KERNEL_OK")
</pallas_src>

<mosaic_0001>
module attributes {stable_mosaic.version = 11 : i64} {
  func.func @gpt2_block_kernel(%arg0: i32, %arg1: memref<1x8x32xf32, #tpu.memory_space<vmem>>, %arg2: memref<32x96xf32, #tpu.memory_space<vmem>>, %arg3: memref<32x32xf32, #tpu.memory_space<vmem>>, %arg4: memref<8x32xf32, #tpu.memory_space<vmem>>, %arg5: memref<1x8x32xf32, #tpu.memory_space<vmem>>, %arg6: memref<8x32xf32, #tpu.memory_space<vmem>>) attributes {dimension_semantics = [#tpu.dimension_semantics<parallel>], iteration_bounds = array<i64: 2>, scalar_prefetch = 0 : i64, scratch_operands = 1 : i64, tpu.core_type = #tpu.core_type<tc>, window_params = [{transform_indices = @transform_0, window_bounds = array<i64: 1, 8, 32>}, {pipeline_mode = #tpu.pipeline_mode<synchronous>, transform_indices = @transform_1, window_bounds = array<i64: 32, 96>}, {pipeline_mode = #tpu.pipeline_mode<synchronous>, transform_indices = @transform_2, window_bounds = array<i64: 32, 32>}, {pipeline_mode = #tpu.pipeline_mode<synchronous>, transform_indices = @transform_3, window_bounds = array<i64: 8, 32>}, {transform_indices = @transform_4, window_bounds = array<i64: 1, 8, 32>}]} {
    %c0 = arith.constant 0 : index
    %c0_0 = arith.constant 0 : index
    %c0_1 = arith.constant 0 : index
    %0 = vector.load %arg1[%c0, %c0_0, %c0_1] : memref<1x8x32xf32, #tpu.memory_space<vmem>>, vector<1x8x32xf32>
    %1 = vector.shape_cast %0 : vector<1x8x32xf32> to vector<8x32xf32>
    %c0_2 = arith.constant 0 : index
    %c0_3 = arith.constant 0 : index
    %2 = vector.load %arg4[%c0_2, %c0_3] : memref<8x32xf32, #tpu.memory_space<vmem>>, vector<1x32xf32>
    %c1 = arith.constant 1 : index
    %c0_4 = arith.constant 0 : index
    %3 = vector.load %arg4[%c1, %c0_4] : memref<8x32xf32, #tpu.memory_space<vmem>>, vector<1x32xf32>
    %c2 = arith.constant 2 : index
    %c0_5 = arith.constant 0 : index
    %4 = vector.load %arg4[%c2, %c0_5] : memref<8x32xf32, #tpu.memory_space<vmem>>, vector<1x32xf32>
    %c3 = arith.constant 3 : index
    %c0_6 = arith.constant 0 : index
    %5 = vector.load %arg4[%c3, %c0_6] : memref<8x32xf32, #tpu.memory_space<vmem>>, vector<1x32xf32>
    %c4 = arith.constant 4 : index
    %c0_7 = arith.constant 0 : index
    %6 = vector.load %arg4[%c4, %c0_7] : memref<8x32xf32, #tpu.memory_space<vmem>>, vector<1x32xf32>
    %c5 = arith.constant 5 : index
    %c0_8 = arith.constant 0 : index
    %7 = vector.load %arg4[%c5, %c0_8] : memref<8x32xf32, #tpu.memory_space<vmem>>, vector<1x32xf32>
    %c6 = arith.constant 6 : index
    %c0_9 = arith.constant 0 : index
    %8 = vector.load %arg4[%c6, %c0_9] : memref<8x32xf32, #tpu.memory_space<vmem>>, vector<1x32xf32>
    %c7 = arith.constant 7 : index
    %c0_10 = arith.constant 0 : index
    %9 = vector.load %arg4[%c7, %c0_10] : memref<8x32xf32, #tpu.memory_space<vmem>>, vector<1x32xf32>
    %cst = arith.constant dense<0.000000e+00> : vector<8xf32>
    %10 = vector.multi_reduction <add>, %1, %cst [1] : vector<8x32xf32> to vector<8xf32>
    %11 = vector.shape_cast %10 : vector<8xf32> to vector<8x1xf32>
    %cst_11 = arith.constant 3.200000e+01 : f32
    %12 = vector.broadcast %cst_11 : f32 to vector<8x1xf32>
    %13 = arith.divf %11, %12 : vector<8x1xf32>
    %14 = vector.broadcast %13 : vector<8x1xf32> to vector<8x32xf32>
    %15 = arith.subf %1, %14 : vector<8x32xf32>
    %16 = arith.mulf %15, %15 : vector<8x32xf32>
    %cst_12 = arith.constant dense<0.000000e+00> : vector<8xf32>
    %17 = vector.multi_reduction <add>, %16, %cst_12 [1] : vector<8x32xf32> to vector<8xf32>
    %18 = vector.shape_cast %17 : vector<8xf32> to vector<8x1xf32>
    %cst_13 = arith.constant 3.200000e+01 : f32
    %19 = vector.broadcast %cst_13 : f32 to vector<8x1xf32>
    %20 = arith.divf %18, %19 : vector<8x1xf32>
    %cst_14 = arith.constant 9.99999974E-6 : f32
    %21 = vector.broadcast %cst_14 : f32 to vector<8x1xf32>
    %22 = arith.addf %20, %21 : vector<8x1xf32>
    %23 = math.rsqrt %22 : vector<8x1xf32>
    %24 = vector.broadcast %13 : vector<8x1xf32> to vector<8x32xf32>
    %25 = arith.subf %1, %24 : vector<8x32xf32>
    %26 = vector.broadcast %23 : vector<8x1xf32> to vector<8x32xf32>
    %27 = arith.mulf %25, %26 : vector<8x32xf32>
    %28 = vector.broadcast %2 : vector<1x32xf32> to vector<8x32xf32>
    %29 = arith.mulf %27, %28 : vector<8x32xf32>
    %30 = vector.broadcast %3 : vector<1x32xf32> to vector<8x32xf32>
    %31 = arith.addf %29, %30 : vector<8x32xf32>
    %c0_15 = arith.constant 0 : index
    %c0_16 = arith.constant 0 : index
    %32 = vector.load %arg2[%c0_15, %c0_16] : memref<32x96xf32, #tpu.memory_space<vmem>>, vector<32x96xf32>
    %cst_17 = arith.constant dense<0.000000e+00> : vector<8x96xf32>
    %33 = tpu.matmul %31, %32, %cst_17 {dimension_numbers = #tpu.dot_dimension_numbers<[1], [0], [0], [1], [0, 0, 1, 1], [], []>} : vector<8x32xf32>, vector<32x96xf32>, vector<8x96xf32> -> vector<8x96xf32>
    %34 = vector.extract_strided_slice %33 {offsets = [0, 0], sizes = [8, 32], strides = [1, 1]} : vector<8x96xf32> to vector<8x32xf32>
    %35 = vector.broadcast %7 : vector<1x32xf32> to vector<8x32xf32>
    %36 = arith.addf %34, %35 : vector<8x32xf32>
    %cst_18 = arith.constant 0.353553385 : f32
    %37 = vector.broadcast %cst_18 : f32 to vector<8x32xf32>
    %38 = arith.mulf %36, %37 : vector<8x32xf32>
    %39 = vector.extract_strided_slice %33 {offsets = [0, 32], sizes = [8, 32], strides = [1, 1]} : vector<8x96xf32> to vector<8x32xf32>
    %40 = vector.broadcast %8 : vector<1x32xf32> to vector<8x32xf32>
    %41 = arith.addf %39, %40 : vector<8x32xf32>
    %42 = vector.extract_strided_slice %33 {offsets = [0, 64], sizes = [8, 32], strides = [1, 1]} : vector<8x96xf32> to vector<8x32xf32>
    %43 = vector.broadcast %9 : vector<1x32xf32> to vector<8x32xf32>
    %44 = arith.addf %42, %43 : vector<8x32xf32>
    %45 = tpu.iota {dimensions = array<i32: 0>} : vector<8x8xi32>
    %46 = tpu.iota {dimensions = array<i32: 1>} : vector<8x8xi32>
    %47 = arith.cmpi sle, %46, %45 : vector<8x8xi32>
    %cst_19 = arith.constant 0.000000e+00 : f32
    %cst_20 = arith.constant -1.000000e+09 : f32
    %48 = vector.broadcast %cst_19 : f32 to vector<8x8xf32>
    %49 = vector.broadcast %cst_20 : f32 to vector<8x8xf32>
    %50 = arith.select %47, %48, %49 : vector<8x8xi1>, vector<8x8xf32>
    %51 = vector.extract_strided_slice %38 {offsets = [0, 0], sizes = [8, 8], strides = [1, 1]} : vector<8x32xf32> to vector<8x8xf32>
    %52 = vector.extract_strided_slice %41 {offsets = [0, 0], sizes = [8, 8], strides = [1, 1]} : vector<8x32xf32> to vector<8x8xf32>
    %53 = vector.extract_strided_slice %44 {offsets = [0, 0], sizes = [8, 8], strides = [1, 1]} : vector<8x32xf32> to vector<8x8xf32>
    %cst_21 = arith.constant dense<0.000000e+00> : vector<8x8xf32>
    %54 = tpu.matmul %51, %52, %cst_21 {dimension_numbers = #tpu.dot_dimension_numbers<[1], [1], [0], [0], [0, 0, 1, 0], [], []>} : vector<8x8xf32>, vector<8x8xf32>, vector<8x8xf32> -> vector<8x8xf32>
    %55 = arith.addf %54, %50 : vector<8x8xf32>
    %cst_22 = arith.constant dense<0xFF800000> : vector<8xf32>
    %56 = vector.multi_reduction <maximumf>, %55, %cst_22 [1] : vector<8x8xf32> to vector<8xf32>
    %57 = vector.shape_cast %56 : vector<8xf32> to vector<8x1xf32>
    %58 = vector.broadcast %57 : vector<8x1xf32> to vector<8x8xf32>
    %59 = arith.subf %55, %58 : vector<8x8xf32>
    %60 = math.exp %59 : vector<8x8xf32>
    %cst_23 = arith.constant dense<0.000000e+00> : vector<8xf32>
    %61 = vector.multi_reduction <add>, %60, %cst_23 [1] : vector<8x8xf32> to vector<8xf32>
    %62 = vector.shape_cast %61 : vector<8xf32> to vector<8x1xf32>
    %cst_24 = arith.constant dense<0.000000e+00> : vector<8x8xf32>
    %63 = tpu.matmul %60, %53, %cst_24 {dimension_numbers = #tpu.dot_dimension_numbers<[1], [0], [0], [1], [0, 0, 1, 1], [], []>} : vector<8x8xf32>, vector<8x8xf32>, vector<8x8xf32> -> vector<8x8xf32>
    %64 = vector.broadcast %62 : vector<8x1xf32> to vector<8x8xf32>
    %65 = arith.divf %63, %64 : vector<8x8xf32>
    %c0_25 = arith.constant 0 : index
    %c0_26 = arith.constant 0 : index
    %66 = vector.load %arg6[%c0_25, %c0_26] : memref<8x32xf32, #tpu.memory_space<vmem>>, vector<8x8xf32>
    tpu.vector_store %arg6[%c0_25, %c0_26], %65 {strides = array<i32>} : memref<8x32xf32, #tpu.memory_space<vmem>>, vector<8x8xf32>,
    %67 = vector.extract_strided_slice %38 {offsets = [0, 8], sizes = [8, 8], strides = [1, 1]} : vector<8x32xf32> to vector<8x8xf32>
    %68 = vector.extract_strided_slice %41 {offsets = [0, 8], sizes = [8, 8], strides = [1, 1]} : vector<8x32xf32> to vector<8x8xf32>
    %69 = vector.extract_strided_slice %44 {offsets = [0, 8], sizes = [8, 8], strides = [1, 1]} : vector<8x32xf32> to vector<8x8xf32>
    %cst_27 = arith.constant dense<0.000000e+00> : vector<8x8xf32>
    %70 = tpu.matmul %67, %68, %cst_27 {dimension_numbers = #tpu.dot_dimension_numbers<[1], [1], [0], [0], [0, 0, 1, 0], [], []>} : vector<8x8xf32>, vector<8x8xf32>, vector<8x8xf32> -> vector<8x8xf32>
    %71 = arith.addf %70, %50 : vector<8x8xf32>
    %cst_28 = arith.constant dense<0xFF800000> : vector<8xf32>
    %72 = vector.multi_reduction <maximumf>, %71, %cst_28 [1] : vector<8x8xf32> to vector<8xf32>
    %73 = vector.shape_cast %72 : vector<8xf32> to vector<8x1xf32>
    %74 = vector.broadcast %73 : vector<8x1xf32> to vector<8x8xf32>
    %75 = arith.subf %71, %74 : vector<8x8xf32>
    %76 = math.exp %75 : vector<8x8xf32>
    %cst_29 = arith.constant dense<0.000000e+00> : vector<8xf32>
    %77 = vector.multi_reduction <add>, %76, %cst_29 [1] : vector<8x8xf32> to vector<8xf32>
    %78 = vector.shape_cast %77 : vector<8xf32> to vector<8x1xf32>
    %cst_30 = arith.constant dense<0.000000e+00> : vector<8x8xf32>
    %79 = tpu.matmul %76, %69, %cst_30 {dimension_numbers = #tpu.dot_dimension_numbers<[1], [0], [0], [1], [0, 0, 1, 1], [], []>} : vector<8x8xf32>, vector<8x8xf32>, vector<8x8xf32> -> vector<8x8xf32>
    %80 = vector.broadcast %78 : vector<8x1xf32> to vector<8x8xf32>
    %81 = arith.divf %79, %80 : vector<8x8xf32>
    %c0_31 = arith.constant 0 : index
    %c8 = arith.constant 8 : index
    %82 = vector.load %arg6[%c0_31, %c8] : memref<8x32xf32, #tpu.memory_space<vmem>>, vector<8x8xf32>
    tpu.vector_store %arg6[%c0_31, %c8], %81 {strides = array<i32>} : memref<8x32xf32, #tpu.memory_space<vmem>>, vector<8x8xf32>,
    %83 = vector.extract_strided_slice %38 {offsets = [0, 16], sizes = [8, 8], strides = [1, 1]} : vector<8x32xf32> to vector<8x8xf32>
    %84 = vector.extract_strided_slice %41 {offsets = [0, 16], sizes = [8, 8], strides = [1, 1]} : vector<8x32xf32> to vector<8x8xf32>
    %85 = vector.extract_strided_slice %44 {offsets = [0, 16], sizes = [8, 8], strides = [1, 1]} : vector<8x32xf32> to vector<8x8xf32>
    %cst_32 = arith.constant dense<0.000000e+00> : vector<8x8xf32>
    %86 = tpu.matmul %83, %84, %cst_32 {dimension_numbers = #tpu.dot_dimension_numbers<[1], [1], [0], [0], [0, 0, 1, 0], [], []>} : vector<8x8xf32>, vector<8x8xf32>, vector<8x8xf32> -> vector<8x8xf32>
    %87 = arith.addf %86, %50 : vector<8x8xf32>
    %cst_33 = arith.constant dense<0xFF800000> : vector<8xf32>
    %88 = vector.multi_reduction <maximumf>, %87, %cst_33 [1] : vector<8x8xf32> to vector<8xf32>
    %89 = vector.shape_cast %88 : vector<8xf32> to vector<8x1xf32>
    %90 = vector.broadcast %89 : vector<8x1xf32> to vector<8x8xf32>
    %91 = arith.subf %87, %90 : vector<8x8xf32>
    %92 = math.exp %91 : vector<8x8xf32>
    %cst_34 = arith.constant dense<0.000000e+00> : vector<8xf32>
    %93 = vector.multi_reduction <add>, %92, %cst_34 [1] : vector<8x8xf32> to vector<8xf32>
    %94 = vector.shape_cast %93 : vector<8xf32> to vector<8x1xf32>
    %cst_35 = arith.constant dense<0.000000e+00> : vector<8x8xf32>
    %95 = tpu.matmul %92, %85, %cst_35 {dimension_numbers = #tpu.dot_dimension_numbers<[1], [0], [0], [1], [0, 0, 1, 1], [], []>} : vector<8x8xf32>, vector<8x8xf32>, vector<8x8xf32> -> vector<8x8xf32>
    %96 = vector.broadcast %94 : vector<8x1xf32> to vector<8x8xf32>
    %97 = arith.divf %95, %96 : vector<8x8xf32>
    %c0_36 = arith.constant 0 : index
    %c16 = arith.constant 16 : index
    %98 = vector.load %arg6[%c0_36, %c16] : memref<8x32xf32, #tpu.memory_space<vmem>>, vector<8x8xf32>
    tpu.vector_store %arg6[%c0_36, %c16], %97 {strides = array<i32>} : memref<8x32xf32, #tpu.memory_space<vmem>>, vector<8x8xf32>,
    %99 = vector.extract_strided_slice %38 {offsets = [0, 24], sizes = [8, 8], strides = [1, 1]} : vector<8x32xf32> to vector<8x8xf32>
    %100 = vector.extract_strided_slice %41 {offsets = [0, 24], sizes = [8, 8], strides = [1, 1]} : vector<8x32xf32> to vector<8x8xf32>
    %101 = vector.extract_strided_slice %44 {offsets = [0, 24], sizes = [8, 8], strides = [1, 1]} : vector<8x32xf32> to vector<8x8xf32>
    %cst_37 = arith.constant dense<0.000000e+00> : vector<8x8xf32>
    %102 = tpu.matmul %99, %100, %cst_37 {dimension_numbers = #tpu.dot_dimension_numbers<[1], [1], [0], [0], [0, 0, 1, 0], [], []>} : vector<8x8xf32>, vector<8x8xf32>, vector<8x8xf32> -> vector<8x8xf32>
    %103 = arith.addf %102, %50 : vector<8x8xf32>
    %cst_38 = arith.constant dense<0xFF800000> : vector<8xf32>
    %104 = vector.multi_reduction <maximumf>, %103, %cst_38 [1] : vector<8x8xf32> to vector<8xf32>
    %105 = vector.shape_cast %104 : vector<8xf32> to vector<8x1xf32>
    %106 = vector.broadcast %105 : vector<8x1xf32> to vector<8x8xf32>
    %107 = arith.subf %103, %106 : vector<8x8xf32>
    %108 = math.exp %107 : vector<8x8xf32>
    %cst_39 = arith.constant dense<0.000000e+00> : vector<8xf32>
    %109 = vector.multi_reduction <add>, %108, %cst_39 [1] : vector<8x8xf32> to vector<8xf32>
    %110 = vector.shape_cast %109 : vector<8xf32> to vector<8x1xf32>
    %cst_40 = arith.constant dense<0.000000e+00> : vector<8x8xf32>
    %111 = tpu.matmul %108, %101, %cst_40 {dimension_numbers = #tpu.dot_dimension_numbers<[1], [0], [0], [1], [0, 0, 1, 1], [], []>} : vector<8x8xf32>, vector<8x8xf32>, vector<8x8xf32> -> vector<8x8xf32>
    %112 = vector.broadcast %110 : vector<8x1xf32> to vector<8x8xf32>
    %113 = arith.divf %111, %112 : vector<8x8xf32>
    %c0_41 = arith.constant 0 : index
    %c24 = arith.constant 24 : index
    %114 = vector.load %arg6[%c0_41, %c24] : memref<8x32xf32, #tpu.memory_space<vmem>>, vector<8x8xf32>
    tpu.vector_store %arg6[%c0_41, %c24], %113 {strides = array<i32>} : memref<8x32xf32, #tpu.memory_space<vmem>>, vector<8x8xf32>,
    %c0_42 = arith.constant 0 : index
    %c0_43 = arith.constant 0 : index
    %115 = vector.load %arg6[%c0_42, %c0_43] : memref<8x32xf32, #tpu.memory_space<vmem>>, vector<8x32xf32>
    %c0_44 = arith.constant 0 : index
    %c0_45 = arith.constant 0 : index
    %116 = vector.load %arg3[%c0_44, %c0_45] : memref<32x32xf32, #tpu.memory_space<vmem>>, vector<32x32xf32>
    %cst_46 = arith.constant dense<0.000000e+00> : vector<8x32xf32>
    %117 = tpu.matmul %115, %116, %cst_46 {dimension_numbers = #tpu.dot_dimension_numbers<[1], [0], [0], [1], [0, 0, 1, 1], [], []>} : vector<8x32xf32>, vector<32x32xf32>, vector<8x32xf32> -> vector<8x32xf32>
    %118 = vector.broadcast %6 : vector<1x32xf32> to vector<8x32xf32>
    %119 = arith.addf %117, %118 : vector<8x32xf32>
    %120 = arith.addf %119, %1 : vector<8x32xf32>
    %cst_47 = arith.constant dense<0.000000e+00> : vector<8xf32>
    %121 = vector.multi_reduction <add>, %120, %cst_47 [1] : vector<8x32xf32> to vector<8xf32>
    %122 = vector.shape_cast %121 : vector<8xf32> to vector<8x1xf32>
    %cst_48 = arith.constant 3.200000e+01 : f32
    %123 = vector.broadcast %cst_48 : f32 to vector<8x1xf32>
    %124 = arith.divf %122, %123 : vector<8x1xf32>
    %125 = vector.broadcast %124 : vector<8x1xf32> to vector<8x32xf32>
    %126 = arith.subf %120, %125 : vector<8x32xf32>
    %127 = arith.mulf %126, %126 : vector<8x32xf32>
    %cst_49 = arith.constant dense<0.000000e+00> : vector<8xf32>
    %128 = vector.multi_reduction <add>, %127, %cst_49 [1] : vector<8x32xf32> to vector<8xf32>
    %129 = vector.shape_cast %128 : vector<8xf32> to vector<8x1xf32>
    %cst_50 = arith.constant 3.200000e+01 : f32
    %130 = vector.broadcast %cst_50 : f32 to vector<8x1xf32>
    %131 = arith.divf %129, %130 : vector<8x1xf32>
    %cst_51 = arith.constant 9.99999974E-6 : f32
    %132 = vector.broadcast %cst_51 : f32 to vector<8x1xf32>
    %133 = arith.addf %131, %132 : vector<8x1xf32>
    %134 = math.rsqrt %133 : vector<8x1xf32>
    %135 = vector.broadcast %124 : vector<8x1xf32> to vector<8x32xf32>
    %136 = arith.subf %120, %135 : vector<8x32xf32>
    %137 = vector.broadcast %134 : vector<8x1xf32> to vector<8x32xf32>
    %138 = arith.mulf %136, %137 : vector<8x32xf32>
    %139 = vector.broadcast %4 : vector<1x32xf32> to vector<8x32xf32>
    %140 = arith.mulf %138, %139 : vector<8x32xf32>
    %141 = vector.broadcast %5 : vector<1x32xf32> to vector<8x32xf32>
    %142 = arith.addf %140, %141 : vector<8x32xf32>
    %c0_52 = arith.constant 0 : index
    %c0_53 = arith.constant 0 : index
    %c0_54 = arith.constant 0 : index
    %143 = vector.load %arg5[%c0_52, %c0_53, %c0_54] : memref<1x8x32xf32, #tpu.memory_space<vmem>>, vector<1x8x32xf32>
    %144 = vector.shape_cast %143 : vector<1x8x32xf32> to vector<8x32xf32>
    %145 = vector.shape_cast %142 : vector<8x32xf32> to vector<1x8x32xf32>
    tpu.vector_store %arg5[%c0_52, %c0_53, %c0_54], %145 {strides = array<i32>} : memref<1x8x32xf32, #tpu.memory_space<vmem>>, vector<1x8x32xf32>,
    return
  }
  func.func @transform_0(%arg0: i32) -> (i32, i32, i32) {
    %c0_i32 = arith.constant 0 : i32
    %c0_i32_0 = arith.constant 0 : i32
    %c0_i32_1 = arith.constant 0 : i32
    return %arg0, %c0_i32, %c0_i32_0 : i32, i32, i32
  }
  func.func @transform_1(%arg0: i32) -> (i32, i32) {
    %c0_i32 = arith.constant 0 : i32
    %c0_i32_0 = arith.constant 0 : i32
    %c0_i32_1 = arith.constant 0 : i32
    return %c0_i32, %c0_i32_0 : i32, i32
  }
  func.func @transform_2(%arg0: i32) -> (i32, i32) {
    %c0_i32 = arith.constant 0 : i32
    %c0_i32_0 = arith.constant 0 : i32
    %c0_i32_1 = arith.constant 0 : i32
    return %c0_i32, %c0_i32_0 : i32, i32
  }
  func.func @transform_3(%arg0: i32) -> (i32, i32) {
    %c0_i32 = arith.constant 0 : i32
    %c0_i32_0 = arith.constant 0 : i32
    %c0_i32_1 = arith.constant 0 : i32
    return %c0_i32, %c0_i32_0 : i32, i32
  }
  func.func @transform_4(%arg0: i32) -> (i32, i32, i32) {
    %c0_i32 = arith.constant 0 : i32
    %c0_i32_0 = arith.constant 0 : i32
    %c0_i32_1 = arith.constant 0 : i32
    return %arg0, %c0_i32, %c0_i32_0 : i32, i32, i32
  }
}

</mosaic_0001>

<llo_original>
// kernel: tiny_gpt2_block.1
$region0: #{tiny_gpt2_block.1}
  #allocation0 [shape = 'u32[]', space=smem, size = 0x4, offset = 0x4, fixed_abs, tag = 'smem constant byte address 0x4 - core index']
  #allocation1 [shape = 'u32[144,128]{1,0:T(1,128)}', space=vmem, size = 0x12000, scoped, tag = 'internal scratch']
  #allocation2 [shape = 'f32[8,32]{1,0:T(8,128)}', space=vmem, size = 0x1000, scoped, tag = 'scratch operand']
  %s0 = inlined_call_operand.hbm [shape: f32[2,8,32], index: 0, kind: input, shape index: {}]
  %s1 = inlined_call_operand.vmem [shape: f32[32,96], index: 1, kind: input, shape index: {}]
  %s2 = inlined_call_operand.vmem [shape: f32[32,32], index: 2, kind: input, shape index: {}]
  %s3 = inlined_call_operand.vmem [shape: f32[8,32], index: 3, kind: input, shape index: {}]
  %s4 = inlined_call_operand.hbm [shape: f32[2,8,32], index: 4, kind: output, shape index: {}]
  %s5 = sld [smem:[#allocation0]]
  $region53: #{tiny_gpt2_block.1} parent=0
    _
  %s7 = ssub.s32 1, %s5
  %s8 = scalar_select 0, %s7, %s5
  $region1: #{tiny_gpt2_block.1} parent=0
    #allocation3 [shape = 'u8[8192]{0}', space=vmem, size = 0x2000, scoped, tag = 'input window, operand 0']
    #allocation4 [shape = 's32[2]{0}', space=sflag, size = 0x8, scoped, tag = 'scoped memory for tiny_gpt2_block.1']
    #allocation5 [shape = 's32[2]{0}', space=sflag, size = 0x8, scoped, tag = 'scoped memory for tiny_gpt2_block.1']
    #allocation6 [shape = 'u8[8192]{0}', space=vmem, size = 0x2000, scoped, tag = 'output window, operand 0']
    %9 = vsyncpa [#allocation4], 0
    %s10 = scalar_lea.sflag [#allocation4], 1
    %11 = vsyncpa %s10, 0
    %12 = vsyncpa [#allocation5], 0
    %s13 = scalar_lea.sflag [#allocation5], 1
    %14 = vsyncpa %s13, 0
    loop: start=0, step=1, limit=4
    $region2: #{tiny_gpt2_block.1} parent=1 // loop_pre_header
      _
    $region3: #{tiny_gpt2_block.1} parent=1 // loop_header
      %s16 = sphi 0, %s20
      %p17 = scmp.ge.s32.totalorder %s16, 4
      %s26 = sphi 0, %s28
      %s29 = sphi 0, %s26
      %s30 = sphi 0, %s29
      %s46 = sphi 0, %s30
      %s50 = sphi 0, %s50
      %s52 = sphi 0, %s50
      %s53 = sphi 0, %s52
      %s67 = sphi 0, %s53
      %s71 = sphi 0, %s71
      %s73 = sphi 0, %s71
      %s74 = sphi 0, %s73
      %s88 = sphi 0, %s74
      %s92 = sphi 0, %s92
      %s94 = sphi 0, %s92
      %s95 = sphi 0, %s94
      %s109 = sphi 0, %s95
      %s115 = sphi 0, %s117
      %s118 = sphi 0, %s115
      %s119 = sphi 0, %s118
      %s135 = sphi 0, %s119
    $region4: #{tiny_gpt2_block.1} parent=1 // loop_header_branch
      %19 = sbr.rel (%p17) target = $region8
    $region5: #{tiny_gpt2_block.1} parent=1 // loop_body
      %s21 = ssub.s32 %s16, 1
      %s22 = ssub.s32 %s16, 2
      %s23 = sadd.s32 %s16, 1
      %s24 = ssub.s32 %s16, %s23
      %p25 = scmp.eq.s32.totalorder %s24, 0
      %s27 = sadd.s32 %s26, 1
      %s28 = scalar_select %p25, %s26, %s27
      %p31 = pneg %p25
      %p32 = scmp.eq.s32.totalorder %s16, 1
      %p33 = por %p31, %p32
      %p34 = scmp.ne.s32.totalorder %s26, %s29
      %p35 = scmp.eq.s32.totalorder %s16, 0
      %p36 = por %p34, %p35
      %p37 = scmp.ne.s32.totalorder %s26, %s29
      %p38 = scmp.eq.s32.totalorder %s21, 1
      %p39 = por %p37, %p38
      %p40 = scmp.ne.s32.totalorder %s29, %s30
      %p41 = scmp.eq.s32.totalorder %s21, 0
      %p42 = por %p40, %p41
      %p43 = scmp.ne.s32.totalorder %s29, %s30
      %p44 = scmp.eq.s32.totalorder %s22, 1
      %p45 = por %p43, %p44
      %p47 = scmp.ne.s32.totalorder %s30, %s46
      %p48 = scmp.eq.s32.totalorder %s22, 0
      %p49 = por %p47, %p48
      %s51 = sadd.s32 %s50, 1
      %p54 = scmp.eq.s32.totalorder %s16, 1
      %p55 = scmp.ne.s32.totalorder %s50, %s52
      %p56 = scmp.eq.s32.totalorder %s16, 0
      %p57 = por %p55, %p56
      %p58 = scmp.ne.s32.totalorder %s50, %s52
      %p59 = scmp.eq.s32.totalorder %s21, 1
      %p60 = por %p58, %p59
      %p61 = scmp.ne.s32.totalorder %s52, %s53
      %p62 = scmp.eq.s32.totalorder %s21, 0
      %p63 = por %p61, %p62
      %p64 = scmp.ne.s32.totalorder %s52, %s53
      %p65 = scmp.eq.s32.totalorder %s22, 1
      %p66 = por %p64, %p65
      %p68 = scmp.ne.s32.totalorder %s53, %s67
      %p69 = scmp.eq.s32.totalorder %s22, 0
      %p70 = por %p68, %p69
      %s72 = sadd.s32 %s71, 1
      %p75 = scmp.eq.s32.totalorder %s16, 1
      %p76 = scmp.ne.s32.totalorder %s71, %s73
      %p77 = scmp.eq.s32.totalorder %s16, 0
      %p78 = por %p76, %p77
      %p79 = scmp.ne.s32.totalorder %s71, %s73
      %p80 = scmp.eq.s32.totalorder %s21, 1
      %p81 = por %p79, %p80
      %p82 = scmp.ne.s32.totalorder %s73, %s74
      %p83 = scmp.eq.s32.totalorder %s21, 0
      %p84 = por %p82, %p83
      %p85 = scmp.ne.s32.totalorder %s73, %s74
      %p86 = scmp.eq.s32.totalorder %s22, 1
      %p87 = por %p85, %p86
      %p89 = scmp.ne.s32.totalorder %s74, %s88
      %p90 = scmp.eq.s32.totalorder %s22, 0
      %p91 = por %p89, %p90
      %s93 = sadd.s32 %s92, 1
      %p96 = scmp.eq.s32.totalorder %s16, 1
      %p97 = scmp.ne.s32.totalorder %s92, %s94
      %p98 = scmp.eq.s32.totalorder %s16, 0
      %p99 = por %p97, %p98
      %p100 = scmp.ne.s32.totalorder %s92, %s94
      %p101 = scmp.eq.s32.totalorder %s21, 1
      %p102 = por %p100, %p101
      %p103 = scmp.ne.s32.totalorder %s94, %s95
      %p104 = scmp.eq.s32.totalorder %s21, 0
      %p105 = por %p103, %p104
      %p106 = scmp.ne.s32.totalorder %s94, %s95
      %p107 = scmp.eq.s32.totalorder %s22, 1
      %p108 = por %p106, %p107
      %p110 = scmp.ne.s32.totalorder %s95, %s109
      %p111 = scmp.eq.s32.totalorder %s22, 0
      %p112 = por %p110, %p111
      %s113 = ssub.s32 %s16, %s23
      %p114 = scmp.eq.s32.totalorder %s113, 0
      %s116 = sadd.s32 %s115, 1
      %s117 = scalar_select %p114, %s115, %s116
      %p120 = pneg %p114
      %p121 = scmp.eq.s32.totalorder %s16, 1
      %p122 = por %p120, %p121
      %p123 = scmp.ne.s32.totalorder %s115, %s118
      %p124 = scmp.eq.s32.totalorder %s16, 0
      %p125 = por %p123, %p124
      %p126 = scmp.ne.s32.totalorder %s115, %s118
      %p127 = scmp.eq.s32.totalorder %s21, 1
      %p128 = por %p126, %p127
      %p129 = scmp.ne.s32.totalorder %s118, %s119
      %p130 = scmp.eq.s32.totalorder %s21, 0
      %p131 = por %p129, %p130
      %p132 = scmp.ne.s32.totalorder %s118, %s119
      %p133 = scmp.eq.s32.totalorder %s22, 1
      %p134 = por %p132, %p133
      %p136 = scmp.ne.s32.totalorder %s119, %s135
      %p137 = scmp.eq.s32.totalorder %s22, 0
      %p138 = por %p136, %p137
      %p139 = scmp.le.s32.totalorder 1, %s16
      %p140 = scmp.lt.s32.totalorder %s16, 3
      %p141 = pnand %p139, %p140
      %p142 = pneg %p141
      // Predicated region
      $region9: #{tiny_gpt2_block.1} parent=5 // pred_check
        _
      $region10: #{tiny_gpt2_block.1} parent=5 // pred_check_branch
        %144 = sbr.rel (%p141) target = $region12
      $region11: #{tiny_gpt2_block.1} parent=5 // pred_region
        %s145 = ssub.s32 %s16, 1
        // Predicated region
        $region13: #{tiny_gpt2_block.1} parent=11 // pred_check
          %p146 = pneg %p63
        $region14: #{tiny_gpt2_block.1} parent=11 // pred_check_branch
          %148 = sbr.rel (%p146) target = $region16
        $region15: #{tiny_gpt2_block.1} parent=11 // pred_region
          _
        $region16: #{tiny_gpt2_block.1} parent=11 // pred_fallthru
          _
        // Predicated region
        $region17: #{tiny_gpt2_block.1} parent=11 // pred_check
          %p149 = pneg %p84
        $region18: #{tiny_gpt2_block.1} parent=11 // pred_check_branch
          %151 = sbr.rel (%p149) target = $region20
        $region19: #{tiny_gpt2_block.1} parent=11 // pred_region
          _
        $region20: #{tiny_gpt2_block.1} parent=11 // pred_fallthru
          _
        // Predicated region
        $region21: #{tiny_gpt2_block.1} parent=11 // pred_check
          %p152 = pneg %p105
        $region22: #{tiny_gpt2_block.1} parent=11 // pred_check_branch
          %154 = sbr.rel (%p152) target = $region24
        $region23: #{tiny_gpt2_block.1} parent=11 // pred_region
          _
        $region24: #{tiny_gpt2_block.1} parent=11 // pred_fallthru
          _
      $region12: #{tiny_gpt2_block.1} parent=5 // pred_fallthru
        _
      %p155 = scmp.lt.s32.totalorder %s16, 2
      // Predicated region
      $region25: #{tiny_gpt2_block.1} parent=5 // pred_check
        %p156 = pneg %p155
      $region26: #{tiny_gpt2_block.1} parent=5 // pred_check_branch
        %158 = sbr.rel (%p156) target = $region28
      $region27: #{tiny_gpt2_block.1} parent=5 // pred_region
        // Predicated region
        $region29: #{tiny_gpt2_block.1} parent=27 // pred_check
          %p159 = pneg %p36
        $region30: #{tiny_gpt2_block.1} parent=27 // pred_check_branch
          %161 = sbr.rel (%p159) target = $region32
        $region31: #{tiny_gpt2_block.1} parent=27 // pred_region
          %s162 = sand.u32 %s26, 1
          %s163 = scalar_lea.sflag [#allocation4], %s162
          %s164 = sand.u32 %s26, 1
          %s165 = smul.addr %s164, 8
          %s166 = scalar_lea.vmem [#allocation3], %s165
          %s168 = ssub.s32 128, 128
          %169 = vsyncadd %s163, %s168
          %s170 = smul.addr %s16, 128
          %s171 = scalar_lea.hbm %s0, %s170
          %s173 = sshll.u32 %s166, 4
          %s174 = int_to_ptr.vmem [resolvable:$true] %s173
          %176 = dma.hbm_to_vmem [thread:$0]  %s171, 128, %s174, %s163
        $region32: #{tiny_gpt2_block.1} parent=27 // pred_fallthru
          _
      $region28: #{tiny_gpt2_block.1} parent=5 // pred_fallthru
        _
      %p177 = scmp.le.s32.totalorder 1, %s16
      %p178 = scmp.lt.s32.totalorder %s16, 3
      %p179 = pnand %p177, %p178
      %p180 = pneg %p179
      // Predicated region
      $region33: #{tiny_gpt2_block.1} parent=5 // pred_check
        _
      $region34: #{tiny_gpt2_block.1} parent=5 // pred_check_branch
        %182 = sbr.rel (%p179) target = $region36
      $region35: #{tiny_gpt2_block.1} parent=5 // pred_region
        %s183 = ssub.s32 %s16, 1
        %s184 = sand.u32 %s29, 1
        %s185 = scalar_lea.sflag [#allocation4], %s184
        %s186 = sand.u32 %s29, 1
        %s187 = smul.addr %s186, 8
        %s188 = scalar_lea.vmem [#allocation3], %s187
        // Predicated region
        $region37: #{tiny_gpt2_block.1} parent=35 // pred_check
          %p189 = pneg %p42
        $region38: #{tiny_gpt2_block.1} parent=35 // pred_check_branch
          %191 = sbr.rel (%p189) target = $region40
        $region39: #{tiny_gpt2_block.1} parent=35 // pred_region
          %192 = dma.done %s185, 128
        $region40: #{tiny_gpt2_block.1} parent=35 // pred_fallthru
          _
        %s193 = sand.u32 %s29, 1
        %s194 = scalar_lea.sflag [#allocation4], %s193
        %s195 = sand.u32 %s29, 1
        %s196 = smul.addr %s195, 8
        %s197 = scalar_lea.vmem [#allocation3], %s196
        %p198 = pneg %p42
        %p199 = pneg %p39
        %p200 = pneg %p63
        %p201 = pneg %p60
        %p202 = pneg %p84
        %p203 = pneg %p81
        %p204 = pneg %p105
        %p205 = pneg %p102
        %p206 = pneg %p131
        %p207 = pneg %p128
        %s208 = sand.u32 %s118, 1
        %s209 = scalar_lea.sflag [#allocation5], %s208
        %s210 = sand.u32 %s118, 1
        %s211 = smul.addr %s210, 8
        %s212 = scalar_lea.vmem [#allocation6], %s211
        %v213 = vld [vmem:[%s188] sm:$0xff]
        %v214 = vld [vmem:[%s3] sm:$0x1]
        %v215 = vld [vmem:[%s3 + $0x1] sm:$0x1]
        %v216 = vld [vmem:[%s3 + $0x2] sm:$0x1]
        %v217 = vld [vmem:[%s3 + $0x3] sm:$0x1]
        %v218 = vld [vmem:[%s3 + $0x4] sm:$0x1]
        %v219 = vld [vmem:[%s3 + $0x5] sm:$0x1]
        %v220 = vld [vmem:[%s3 + $0x6] sm:$0x1]
        %v221 = vld [vmem:[%s3 + $0x7] sm:$0x1]
        %vm222 = vcmask 261120
        %v223 = vsel %vm222, %v213, 0.0
        %224 = vadd.xlane.f32.xlu0 %v223
        %v225 = vpop.xlane.xlu0 %224
        %v226 = vrcp.pop 32.0
        %v227 = vmul.f32 %v225, %v226
        %v228 = vsub.f32 %v213, %v227
        %v229 = vmul.f32 %v228, %v228
        %v230 = vsel %vm222, %v229, 0.0
        %231 = vadd.xlane.f32.xlu0 %v230
        %v232 = vpop.xlane.xlu0 %231
        %v233 = vmul.f32 %v232, %v226
        %v234 = vadd.f32 %v233, 1e-05
        %v235 = vrsqrt.pop %v234
        %v236 = vmul.f32 %v228, %v235
        %v237 = vlaneseq
        %v238 = vshrl.u32 %v237, 7
        %v239 = vsub.s32 0, %v238
        %v240 = vrot.slane %v214, %v239
        %v241 = vmul.f32 %v236, %v240
        %v242 = vlaneseq
        %v243 = vshrl.u32 %v242, 7
        %v244 = vsub.s32 0, %v243
        %v245 = vrot.slane %v215, %v244
        %v246 = vadd.f32 %v241, %v245
        %v247 = vld [vmem:[%s1] sm:$0xff]
        %v248 = vld [vmem:[%s1 + $0x8] sm:$0xff]
        %v249 = vld [vmem:[%s1 + $0x10] sm:$0xff]
        %v250 = vld [vmem:[%s1 + $0x18] sm:$0xff]
        %v252 = vsel %vm222, %v246, 0
        %254 = vmatprep.subr.mxu0 0.0
        %255 = vmatpush1.msra.mxu0 %v247
        %256 = vmatprep.subr.mxu0 0.0
        %257 = vmatpush1.msra.mxu0 %v248
        %258 = vmatprep.subr.mxu0 0.0
        %259 = vmatpush1.msra.mxu0 %v249
        %260 = vmatprep.subr.mxu0 0.0
        %261 = vmatpush1.msra.mxu0 %v250
        %262 = vmatprep.subr.mxu0 0.0
        %263 = vmatpush1.msra.mxu0 0.0
        %264 = vmatprep.subr.mxu0 0.0
        %265 = vmatpush1.msra.mxu0 0.0
        %266 = vmatprep.subr.mxu0 0.0
        %267 = vmatpush1.msra.mxu0 0.0
        %268 = vmatprep.subr.mxu0 0.0
        %269 = vmatpush1.msra.mxu0 0.0
        %270 = vmatprep.subr.mxu0 0.0
        %271 = vmatpush1.msra.mxu0 0.0
        %272 = vmatprep.subr.mxu0 0.0
        %273 = vmatpush1.msra.mxu0 0.0
        %274 = vmatprep.subr.mxu0 0.0
        %275 = vmatpush1.msra.mxu0 0.0
        %276 = vmatprep.subr.mxu0 0.0
        %277 = vmatpush1.msra.mxu0 0.0
        %278 = vmatprep.subr.mxu0 0.0
        %279 = vmatpush1.msra.mxu0 0.0
        %280 = vmatprep.subr.mxu0 0.0
        %281 = vmatpush1.msra.mxu0 0.0
        %282 = vmatprep.subr.mxu0 0.0
        %283 = vmatpush1.msra.mxu0 0.0
        %284 = vmatprep.subr.mxu0 0.0
        %285 = vmatpush1.msra.mxu0 0.0
        %286 = vmatprep.subr.mxu0 0.0
        %287 = vmatpush1.msra.mxu0 0.0
        %288 = vmatprep.subr.mxu0 0.0
        %289 = vmatpush1.msra.mxu0 0.0
        %290 = vmatprep.subr.mxu0 0.0
        %291 = vmatpush1.msra.mxu0 0.0
        %292 = vmatprep.subr.mxu0 0.0
        %293 = vmatpush1.msra.mxu0 0.0
        %294 = vmatprep.subr.mxu0 0.0
        %295 = vmatpush1.msra.mxu0 0.0
        %296 = vmatprep.subr.mxu0 0.0
        %297 = vmatpush1.msra.mxu0 0.0
        %298 = vmatprep.subr.mxu0 0.0
        %299 = vmatpush1.msra.mxu0 0.0
        %300 = vmatprep.subr.mxu0 0.0
        %301 = vmatpush1.msra.mxu0 0.0
        %302 = vmatprep.subr.mxu0 0.0
        %303 = vmatpush1.msra.mxu0 0.0
        %304 = vmatprep.subr.mxu0 0.0
        %305 = vmatpush1.msra.mxu0 0.0
        %306 = vmatprep.subr.mxu0 0.0
        %307 = vmatpush1.msra.mxu0 0.0
        %308 = vmatprep.subr.mxu0 0.0
        %309 = vmatpush1.msra.mxu0 0.0
        %310 = vmatprep.subr.mxu0 0.0
        %311 = vmatpush1.msra.mxu0 0.0
        %312 = vmatprep.subr.mxu0 0.0
        %313 = vmatpush1.msra.mxu0 0.0
        %314 = vmatprep.subr.mxu0 0.0
        %315 = vmatpush1.msra.mxu0 0.0
        %316 = vmatprep.subr.mxu0 0.0
        %317 = vmatpush1.msra.mxu0 0.0
        %318 = vmatprep.mubr.f32.mxu0 0.0
        %319 = vmatmul.mubr.f32.gmra.mrb[0].mxu0 %v252
        %v320 = vpop.f32.mrb[0].mxu0
        %v321 = vadd.f32 0.0, %v320
        %v322 = vpop.f32.mrb[0].mxu0
        %323 = vdwg.mxu0
        %v324 = vlaneseq
        %v325 = vshrl.u32 %v324, 7
        %v326 = vsub.s32 0, %v325
        %v327 = vrot.slane %v219, %v326
        %v328 = vadd.f32 %v321, %v327
        %v329 = vmul.f32 %v328, 0.35355338
        %v330 = vlaneseq
        %v331 = vshrl.u32 %v330, 7
        %v332 = vsub.s32 0, %v331
        %v333 = vrot.slane %v220, %v332
        %335 = vrot.lane.b32.xlu0 %v333, 32
        %v336 = vpop.permute.xlu0 %335
        %v338 = vadd.f32 %v321, %v336
        %v339 = vlaneseq
        %v340 = vshrl.u32 %v339, 7
        %v341 = vsub.s32 0, %v340
        %v342 = vrot.slane %v221, %v341
        %344 = vrot.lane.b32.xlu0 %v342, 64
        %v345 = vpop.permute.xlu0 %344
        %v347 = vadd.f32 %v321, %v345
        %v348 = vlaneseq
        %v349 = vshrl.u32 %v348, 7
        %v350 = vlaneseq
        %v351 = vand.u32 %v350, 127
        %vm352 = vcmp.le.s32.totalorder %v351, %v349
        %v353 = vsel %vm352, 0.0, -1e+09
        %355 = vrot.lane.b32.xlu0 %v338, 96
        %v356 = vpop.permute.xlu0 %355
        %vm357 = vcmask 64512
        %v359 = vsel %vm357, %v329, 0
        %v361 = vsel %vm357, %v356, 0
        %363 = vmatprep.subr.mxu0 0.0
        %364 = vmatpush1.xpose.msra.mxu0 %v361
        %365 = vmatprep.subr.mxu0 0.0
        %366 = vmatpush1.xpose.msra.mxu0 0.0
        %367 = vmatprep.subr.mxu0 0.0
        %368 = vmatpush1.xpose.msra.mxu0 0.0
        %369 = vmatprep.subr.mxu0 0.0
        %370 = vmatpush1.xpose.msra.mxu0 0.0
        %371 = vmatprep.subr.mxu0 0.0
        %372 = vmatpush1.xpose.msra.mxu0 0.0
        %373 = vmatprep.subr.mxu0 0.0
        %374 = vmatpush1.xpose.msra.mxu0 0.0
        %375 = vmatprep.subr.mxu0 0.0
        %376 = vmatpush1.xpose.msra.mxu0 0.0
        %377 = vmatprep.subr.mxu0 0.0
        %378 = vmatpush1.xpose.msra.mxu0 0.0
        %379 = vmatprep.subr.mxu0 0.0
        %380 = vmatpush1.xpose.msra.mxu0 0.0
        %381 = vmatprep.subr.mxu0 0.0
        %382 = vmatpush1.xpose.msra.mxu0 0.0
        %383 = vmatprep.subr.mxu0 0.0
        %384 = vmatpush1.xpose.msra.mxu0 0.0
        %385 = vmatprep.subr.mxu0 0.0
        %386 = vmatpush1.xpose.msra.mxu0 0.0
        %387 = vmatprep.subr.mxu0 0.0
        %388 = vmatpush1.xpose.msra.mxu0 0.0
        %389 = vmatprep.subr.mxu0 0.0
        %390 = vmatpush1.xpose.msra.mxu0 0.0
        %391 = vmatprep.subr.mxu0 0.0
        %392 = vmatpush1.xpose.msra.mxu0 0.0
        %393 = vmatprep.subr.mxu0 0.0
        %394 = vmatpush1.xpose.msra.mxu0 0.0
        %395 = vmatprep.subr.mxu0 0.0
        %396 = vmatpush1.xpose.msra.mxu0 0.0
        %397 = vmatprep.subr.mxu0 0.0
        %398 = vmatpush1.xpose.msra.mxu0 0.0
        %399 = vmatprep.subr.mxu0 0.0
        %400 = vmatpush1.xpose.msra.mxu0 0.0
        %401 = vmatprep.subr.mxu0 0.0
        %402 = vmatpush1.xpose.msra.mxu0 0.0
        %403 = vmatprep.subr.mxu0 0.0
        %404 = vmatpush1.xpose.msra.mxu0 0.0
        %405 = vmatprep.subr.mxu0 0.0
        %406 = vmatpush1.xpose.msra.mxu0 0.0
        %407 = vmatprep.subr.mxu0 0.0
        %408 = vmatpush1.xpose.msra.mxu0 0.0
        %409 = vmatprep.subr.mxu0 0.0
        %410 = vmatpush1.xpose.msra.mxu0 0.0
        %411 = vmatprep.subr.mxu0 0.0
        %412 = vmatpush1.xpose.msra.mxu0 0.0
        %413 = vmatprep.subr.mxu0 0.0
        %414 = vmatpush1.xpose.msra.mxu0 0.0
        %415 = vmatprep.subr.mxu0 0.0
        %416 = vmatpush1.xpose.msra.mxu0 0.0
        %417 = vmatprep.subr.mxu0 0.0
        %418 = vmatpush1.xpose.msra.mxu0 0.0
        %419 = vmatprep.subr.mxu0 0.0
        %420 = vmatpush1.xpose.msra.mxu0 0.0
        %421 = vmatprep.subr.mxu0 0.0
        %422 = vmatpush1.xpose.msra.mxu0 0.0
        %423 = vmatprep.subr.mxu0 0.0
        %424 = vmatpush1.xpose.msra.mxu0 0.0
        %425 = vmatprep.subr.mxu0 0.0
        %426 = vmatpush1.xpose.msra.mxu0 0.0
        %427 = vmatprep.mubr.f32.mxu0 0.0
        %428 = vmatmul.mubr.f32.gmra.mrb[0].mxu0 %v359
        %v429 = vpop.f32.mrb[0].mxu0
        %v430 = vadd.f32 %v353, %v429
        %v431 = vpop.f32.mrb[0].mxu0
        %432 = vdwg.mxu0
        %v433 = vsel %vm357, %v430, -inf
        %434 = vmax.xlane.f32.xlu0 %v433
        %v435 = vpop.xlane.xlu0 %434
        %v436 = vsub.f32 %v430, %v435
        %v437 = vmul.f32 %v436, 1.442695
        %v438 = vpow.pop %v437
        %v439 = vsel %vm357, %v438, 0.0
        %440 = vadd.xlane.f32.xlu0 %v439
        %v441 = vpop.xlane.xlu0 %440
        %443 = vrot.lane.b32.xlu0 %v347, 64
        %v444 = vpop.permute.xlu0 %443
        %v447 = vsel %vm357, %v438, 0
        %449 = vmatprep.subr.mxu0 0.0
        %450 = vmatpush1.msra.mxu0 %v444
        %451 = vmatprep.subr.mxu0 0.0
        %452 = vmatpush1.msra.mxu0 0.0
        %453 = vmatprep.subr.mxu0 0.0
        %454 = vmatpush1.msra.mxu0 0.0
        %455 = vmatprep.subr.mxu0 0.0
        %456 = vmatpush1.msra.mxu0 0.0
        %457 = vmatprep.subr.mxu0 0.0
        %458 = vmatpush1.msra.mxu0 0.0
        %459 = vmatprep.subr.mxu0 0.0
        %460 = vmatpush1.msra.mxu0 0.0
        %461 = vmatprep.subr.mxu0 0.0
        %462 = vmatpush1.msra.mxu0 0.0
        %463 = vmatprep.subr.mxu0 0.0
        %464 = vmatpush1.msra.mxu0 0.0
        %465 = vmatprep.subr.mxu0 0.0
        %466 = vmatpush1.msra.mxu0 0.0
        %467 = vmatprep.subr.mxu0 0.0
        %468 = vmatpush1.msra.mxu0 0.0
        %469 = vmatprep.subr.mxu0 0.0
        %470 = vmatpush1.msra.mxu0 0.0
        %471 = vmatprep.subr.mxu0 0.0
        %472 = vmatpush1.msra.mxu0 0.0
        %473 = vmatprep.subr.mxu0 0.0
        %474 = vmatpush1.msra.mxu0 0.0
        %475 = vmatprep.subr.mxu0 0.0
        %476 = vmatpush1.msra.mxu0 0.0
        %477 = vmatprep.subr.mxu0 0.0
        %478 = vmatpush1.msra.mxu0 0.0
        %479 = vmatprep.subr.mxu0 0.0
        %480 = vmatpush1.msra.mxu0 0.0
        %481 = vmatprep.subr.mxu0 0.0
        %482 = vmatpush1.msra.mxu0 0.0
        %483 = vmatprep.subr.mxu0 0.0
        %484 = vmatpush1.msra.mxu0 0.0
        %485 = vmatprep.subr.mxu0 0.0
        %486 = vmatpush1.msra.mxu0 0.0
        %487 = vmatprep.subr.mxu0 0.0
        %488 = vmatpush1.msra.mxu0 0.0
        %489 = vmatprep.subr.mxu0 0.0
        %490 = vmatpush1.msra.mxu0 0.0
        %491 = vmatprep.subr.mxu0 0.0
        %492 = vmatpush1.msra.mxu0 0.0
        %493 = vmatprep.subr.mxu0 0.0
        %494 = vmatpush1.msra.mxu0 0.0
        %495 = vmatprep.subr.mxu0 0.0
        %496 = vmatpush1.msra.mxu0 0.0
        %497 = vmatprep.subr.mxu0 0.0
        %498 = vmatpush1.msra.mxu0 0.0
        %499 = vmatprep.subr.mxu0 0.0
        %500 = vmatpush1.msra.mxu0 0.0
        %501 = vmatprep.subr.mxu0 0.0
        %502 = vmatpush1.msra.mxu0 0.0
        %503 = vmatprep.subr.mxu0 0.0
        %504 = vmatpush1.msra.mxu0 0.0
        %505 = vmatprep.subr.mxu0 0.0
        %506 = vmatpush1.msra.mxu0 0.0
        %507 = vmatprep.subr.mxu0 0.0
        %508 = vmatpush1.msra.mxu0 0.0
        %509 = vmatprep.subr.mxu0 0.0
        %510 = vmatpush1.msra.mxu0 0.0
        %511 = vmatprep.subr.mxu0 0.0
        %512 = vmatpush1.msra.mxu0 0.0
        %513 = vmatprep.mubr.f32.mxu0 0.0
        %514 = vmatmul.mubr.f32.gmra.mrb[0].mxu0 %v447
        %v515 = vpop.f32.mrb[0].mxu0
        %v516 = vadd.f32 0.0, %v515
        %v517 = vpop.f32.mrb[0].mxu0
        %518 = vdwg.mxu0
        %v519 = vrcp.pop %v441
        %v520 = vmul.f32 %v516, %v519
        %521 = vst.msk [vmem:[#allocation2] sm:$0xff] %vm357, %v520
        %522 = vrot.lane.b32.xlu0 %v329, 120
        %v523 = vpop.permute.xlu0 %522
        %524 = vrot.lane.b32.xlu0 %v338, 88
        %v525 = vpop.permute.xlu0 %524
        %v526 = vsel %vm357, %v523, 0
        %v528 = vsel %vm357, %v525, 0
        %530 = vmatprep.subr.mxu0 0.0
        %531 = vmatpush1.xpose.msra.mxu0 %v528
        %532 = vmatprep.subr.mxu0 0.0
        %533 = vmatpush1.xpose.msra.mxu0 0.0
        %534 = vmatprep.subr.mxu0 0.0
        %535 = vmatpush1.xpose.msra.mxu0 0.0
        %536 = vmatprep.subr.mxu0 0.0
        %537 = vmatpush1.xpose.msra.mxu0 0.0
        %538 = vmatprep.subr.mxu0 0.0
        %539 = vmatpush1.xpose.msra.mxu0 0.0
        %540 = vmatprep.subr.mxu0 0.0
        %541 = vmatpush1.xpose.msra.mxu0 0.0
        %542 = vmatprep.subr.mxu0 0.0
        %543 = vmatpush1.xpose.msra.mxu0 0.0
        %544 = vmatprep.subr.mxu0 0.0
        %545 = vmatpush1.xpose.msra.mxu0 0.0
        %546 = vmatprep.subr.mxu0 0.0
        %547 = vmatpush1.xpose.msra.mxu0 0.0
        %548 = vmatprep.subr.mxu0 0.0
        %549 = vmatpush1.xpose.msra.mxu0 0.0
        %550 = vmatprep.subr.mxu0 0.0
        %551 = vmatpush1.xpose.msra.mxu0 0.0
        %552 = vmatprep.subr.mxu0 0.0
        %553 = vmatpush1.xpose.msra.mxu0 0.0
        %554 = vmatprep.subr.mxu0 0.0
        %555 = vmatpush1.xpose.msra.mxu0 0.0
        %556 = vmatprep.subr.mxu0 0.0
        %557 = vmatpush1.xpose.msra.mxu0 0.0
        %558 = vmatprep.subr.mxu0 0.0
        %559 = vmatpush1.xpose.msra.mxu0 0.0
        %560 = vmatprep.subr.mxu0 0.0
        %561 = vmatpush1.xpose.msra.mxu0 0.0
        %562 = vmatprep.subr.mxu0 0.0
        %563 = vmatpush1.xpose.msra.mxu0 0.0
        %564 = vmatprep.subr.mxu0 0.0
        %565 = vmatpush1.xpose.msra.mxu0 0.0
        %566 = vmatprep.subr.mxu0 0.0
        %567 = vmatpush1.xpose.msra.mxu0 0.0
        %568 = vmatprep.subr.mxu0 0.0
        %569 = vmatpush1.xpose.msra.mxu0 0.0
        %570 = vmatprep.subr.mxu0 0.0
        %571 = vmatpush1.xpose.msra.mxu0 0.0
        %572 = vmatprep.subr.mxu0 0.0
        %573 = vmatpush1.xpose.msra.mxu0 0.0
        %574 = vmatprep.subr.mxu0 0.0
        %575 = vmatpush1.xpose.msra.mxu0 0.0
        %576 = vmatprep.subr.mxu0 0.0
        %577 = vmatpush1.xpose.msra.mxu0 0.0
        %578 = vmatprep.subr.mxu0 0.0
        %579 = vmatpush1.xpose.msra.mxu0 0.0
        %580 = vmatprep.subr.mxu0 0.0
        %581 = vmatpush1.xpose.msra.mxu0 0.0
        %582 = vmatprep.subr.mxu0 0.0
        %583 = vmatpush1.xpose.msra.mxu0 0.0
        %584 = vmatprep.subr.mxu0 0.0
        %585 = vmatpush1.xpose.msra.mxu0 0.0
        %586 = vmatprep.subr.mxu0 0.0
        %587 = vmatpush1.xpose.msra.mxu0 0.0
        %588 = vmatprep.subr.mxu0 0.0
        %589 = vmatpush1.xpose.msra.mxu0 0.0
        %590 = vmatprep.subr.mxu0 0.0
        %591 = vmatpush1.xpose.msra.mxu0 0.0
        %592 = vmatprep.subr.mxu0 0.0
        %593 = vmatpush1.xpose.msra.mxu0 0.0
        %594 = vmatprep.mubr.f32.mxu0 0.0
        %595 = vmatmul.mubr.f32.gmra.mrb[0].mxu0 %v526
        %v596 = vpop.f32.mrb[0].mxu0
        %v597 = vadd.f32 %v353, %v596
        %v598 = vpop.f32.mrb[0].mxu0
        %599 = vdwg.mxu0
        %v600 = vsel %vm357, %v597, -inf
        %601 = vmax.xlane.f32.xlu0 %v600
        %v602 = vpop.xlane.xlu0 %601
        %v603 = vsub.f32 %v597, %v602
        %v604 = vmul.f32 %v603, 1.442695
        %v605 = vpow.pop %v604
        %v606 = vsel %vm357, %v605, 0.0
        %607 = vadd.xlane.f32.xlu0 %v606
        %v608 = vpop.xlane.xlu0 %607
        %609 = vrot.lane.b32.xlu0 %v347, 56
        %v610 = vpop.permute.xlu0 %609
        %v613 = vsel %vm357, %v605, 0
        %615 = vmatprep.subr.mxu0 0.0
        %616 = vmatpush1.msra.mxu0 %v610
        %617 = vmatprep.subr.mxu0 0.0
        %618 = vmatpush1.msra.mxu0 0.0
        %619 = vmatprep.subr.mxu0 0.0
        %620 = vmatpush1.msra.mxu0 0.0
        %621 = vmatprep.subr.mxu0 0.0
        %622 = vmatpush1.msra.mxu0 0.0
        %623 = vmatprep.subr.mxu0 0.0
        %624 = vmatpush1.msra.mxu0 0.0
        %625 = vmatprep.subr.mxu0 0.0
        %626 = vmatpush1.msra.mxu0 0.0
        %627 = vmatprep.subr.mxu0 0.0
        %628 = vmatpush1.msra.mxu0 0.0
        %629 = vmatprep.subr.mxu0 0.0
        %630 = vmatpush1.msra.mxu0 0.0
        %631 = vmatprep.subr.mxu0 0.0
        %632 = vmatpush1.msra.mxu0 0.0
        %633 = vmatprep.subr.mxu0 0.0
        %634 = vmatpush1.msra.mxu0 0.0
        %635 = vmatprep.subr.mxu0 0.0
        %636 = vmatpush1.msra.mxu0 0.0
        %637 = vmatprep.subr.mxu0 0.0
        %638 = vmatpush1.msra.mxu0 0.0
        %639 = vmatprep.subr.mxu0 0.0
        %640 = vmatpush1.msra.mxu0 0.0
        %641 = vmatprep.subr.mxu0 0.0
        %642 = vmatpush1.msra.mxu0 0.0
        %643 = vmatprep.subr.mxu0 0.0
        %644 = vmatpush1.msra.mxu0 0.0
        %645 = vmatprep.subr.mxu0 0.0
        %646 = vmatpush1.msra.mxu0 0.0
        %647 = vmatprep.subr.mxu0 0.0
        %648 = vmatpush1.msra.mxu0 0.0
        %649 = vmatprep.subr.mxu0 0.0
        %650 = vmatpush1.msra.mxu0 0.0
        %651 = vmatprep.subr.mxu0 0.0
        %652 = vmatpush1.msra.mxu0 0.0
        %653 = vmatprep.subr.mxu0 0.0
        %654 = vmatpush1.msra.mxu0 0.0
        %655 = vmatprep.subr.mxu0 0.0
        %656 = vmatpush1.msra.mxu0 0.0
        %657 = vmatprep.subr.mxu0 0.0
        %658 = vmatpush1.msra.mxu0 0.0
        %659 = vmatprep.subr.mxu0 0.0
        %660 = vmatpush1.msra.mxu0 0.0
        %661 = vmatprep.subr.mxu0 0.0
        %662 = vmatpush1.msra.mxu0 0.0
        %663 = vmatprep.subr.mxu0 0.0
        %664 = vmatpush1.msra.mxu0 0.0
        %665 = vmatprep.subr.mxu0 0.0
        %666 = vmatpush1.msra.mxu0 0.0
        %667 = vmatprep.subr.mxu0 0.0
        %668 = vmatpush1.msra.mxu0 0.0
        %669 = vmatprep.subr.mxu0 0.0
        %670 = vmatpush1.msra.mxu0 0.0
        %671 = vmatprep.subr.mxu0 0.0
        %672 = vmatpush1.msra.mxu0 0.0
        %673 = vmatprep.subr.mxu0 0.0
        %674 = vmatpush1.msra.mxu0 0.0
        %675 = vmatprep.subr.mxu0 0.0
        %676 = vmatpush1.msra.mxu0 0.0
        %677 = vmatprep.subr.mxu0 0.0
        %678 = vmatpush1.msra.mxu0 0.0
        %679 = vmatprep.mubr.f32.mxu0 0.0
        %680 = vmatmul.mubr.f32.gmra.mrb[0].mxu0 %v613
        %v681 = vpop.f32.mrb[0].mxu0
        %v682 = vadd.f32 0.0, %v681
        %v683 = vpop.f32.mrb[0].mxu0
        %684 = vdwg.mxu0
        %v685 = vrcp.pop %v608
        %v686 = vmul.f32 %v682, %v685
        %688 = vrot.lane.b32.xlu0 %v686, 8
        %v689 = vpop.permute.xlu0 %688
        %vm691 = vcmask 130112
        %692 = vst.msk [vmem:[#allocation2] sm:$0xff] %vm691, %v689
        %693 = vrot.lane.b32.xlu0 %v329, 112
        %v694 = vpop.permute.xlu0 %693
        %695 = vrot.lane.b32.xlu0 %v338, 80
        %v696 = vpop.permute.xlu0 %695
        %v697 = vsel %vm357, %v694, 0
        %v699 = vsel %vm357, %v696, 0
        %701 = vmatprep.subr.mxu0 0.0
        %702 = vmatpush1.xpose.msra.mxu0 %v699
        %703 = vmatprep.subr.mxu0 0.0
        %704 = vmatpush1.xpose.msra.mxu0 0.0
        %705 = vmatprep.subr.mxu0 0.0
        %706 = vmatpush1.xpose.msra.mxu0 0.0
        %707 = vmatprep.subr.mxu0 0.0
        %708 = vmatpush1.xpose.msra.mxu0 0.0
        %709 = vmatprep.subr.mxu0 0.0
        %710 = vmatpush1.xpose.msra.mxu0 0.0
        %711 = vmatprep.subr.mxu0 0.0
        %712 = vmatpush1.xpose.msra.mxu0 0.0
        %713 = vmatprep.subr.mxu0 0.0
        %714 = vmatpush1.xpose.msra.mxu0 0.0
        %715 = vmatprep.subr.mxu0 0.0
        %716 = vmatpush1.xpose.msra.mxu0 0.0
        %717 = vmatprep.subr.mxu0 0.0
        %718 = vmatpush1.xpose.msra.mxu0 0.0
        %719 = vmatprep.subr.mxu0 0.0
        %720 = vmatpush1.xpose.msra.mxu0 0.0
        %721 = vmatprep.subr.mxu0 0.0
        %722 = vmatpush1.xpose.msra.mxu0 0.0
        %723 = vmatprep.subr.mxu0 0.0
        %724 = vmatpush1.xpose.msra.mxu0 0.0
        %725 = vmatprep.subr.mxu0 0.0
        %726 = vmatpush1.xpose.msra.mxu0 0.0
        %727 = vmatprep.subr.mxu0 0.0
        %728 = vmatpush1.xpose.msra.mxu0 0.0
        %729 = vmatprep.subr.mxu0 0.0
        %730 = vmatpush1.xpose.msra.mxu0 0.0
        %731 = vmatprep.subr.mxu0 0.0
        %732 = vmatpush1.xpose.msra.mxu0 0.0
        %733 = vmatprep.subr.mxu0 0.0
        %734 = vmatpush1.xpose.msra.mxu0 0.0
        %735 = vmatprep.subr.mxu0 0.0
        %736 = vmatpush1.xpose.msra.mxu0 0.0
        %737 = vmatprep.subr.mxu0 0.0
        %738 = vmatpush1.xpose.msra.mxu0 0.0
        %739 = vmatprep.subr.mxu0 0.0
        %740 = vmatpush1.xpose.msra.mxu0 0.0
        %741 = vmatprep.subr.mxu0 0.0
        %742 = vmatpush1.xpose.msra.mxu0 0.0
        %743 = vmatprep.subr.mxu0 0.0
        %744 = vmatpush1.xpose.msra.mxu0 0.0
        %745 = vmatprep.subr.mxu0 0.0
        %746 = vmatpush1.xpose.msra.mxu0 0.0
        %747 = vmatprep.subr.mxu0 0.0
        %748 = vmatpush1.xpose.msra.mxu0 0.0
        %749 = vmatprep.subr.mxu0 0.0
        %750 = vmatpush1.xpose.msra.mxu0 0.0
        %751 = vmatprep.subr.mxu0 0.0
        %752 = vmatpush1.xpose.msra.mxu0 0.0
        %753 = vmatprep.subr.mxu0 0.0
        %754 = vmatpush1.xpose.msra.mxu0 0.0
        %755 = vmatprep.subr.mxu0 0.0
        %756 = vmatpush1.xpose.msra.mxu0 0.0
        %757 = vmatprep.subr.mxu0 0.0
        %758 = vmatpush1.xpose.msra.mxu0 0.0
        %759 = vmatprep.subr.mxu0 0.0
        %760 = vmatpush1.xpose.msra.mxu0 0.0
        %761 = vmatprep.subr.mxu0 0.0
        %762 = vmatpush1.xpose.msra.mxu0 0.0
        %763 = vmatprep.subr.mxu0 0.0
        %764 = vmatpush1.xpose.msra.mxu0 0.0
        %765 = vmatprep.mubr.f32.mxu0 0.0
        %766 = vmatmul.mubr.f32.gmra.mrb[0].mxu0 %v697
        %v767 = vpop.f32.mrb[0].mxu0
        %v768 = vadd.f32 %v353, %v767
        %v769 = vpop.f32.mrb[0].mxu0
        %770 = vdwg.mxu0
        %v771 = vsel %vm357, %v768, -inf
        %772 = vmax.xlane.f32.xlu0 %v771
        %v773 = vpop.xlane.xlu0 %772
        %v774 = vsub.f32 %v768, %v773
        %v775 = vmul.f32 %v774, 1.442695
        %v776 = vpow.pop %v775
        %v777 = vsel %vm357, %v776, 0.0
        %778 = vadd.xlane.f32.xlu0 %v777
        %v779 = vpop.xlane.xlu0 %778
        %780 = vrot.lane.b32.xlu0 %v347, 48
        %v781 = vpop.permute.xlu0 %780
        %v784 = vsel %vm357, %v776, 0
        %786 = vmatprep.subr.mxu0 0.0
        %787 = vmatpush1.msra.mxu0 %v781
        %788 = vmatprep.subr.mxu0 0.0
        %789 = vmatpush1.msra.mxu0 0.0
        %790 = vmatprep.subr.mxu0 0.0
        %791 = vmatpush1.msra.mxu0 0.0
        %792 = vmatprep.subr.mxu0 0.0
        %793 = vmatpush1.msra.mxu0 0.0
        %794 = vmatprep.subr.mxu0 0.0
        %795 = vmatpush1.msra.mxu0 0.0
        %796 = vmatprep.subr.mxu0 0.0
        %797 = vmatpush1.msra.mxu0 0.0
        %798 = vmatprep.subr.mxu0 0.0
        %799 = vmatpush1.msra.mxu0 0.0
        %800 = vmatprep.subr.mxu0 0.0
        %801 = vmatpush1.msra.mxu0 0.0
        %802 = vmatprep.subr.mxu0 0.0
        %803 = vmatpush1.msra.mxu0 0.0
        %804 = vmatprep.subr.mxu0 0.0
        %805 = vmatpush1.msra.mxu0 0.0
        %806 = vmatprep.subr.mxu0 0.0
        %807 = vmatpush1.msra.mxu0 0.0
        %808 = vmatprep.subr.mxu0 0.0
        %809 = vmatpush1.msra.mxu0 0.0
        %810 = vmatprep.subr.mxu0 0.0
        %811 = vmatpush1.msra.mxu0 0.0
        %812 = vmatprep.subr.mxu0 0.0
        %813 = vmatpush1.msra.mxu0 0.0
        %814 = vmatprep.subr.mxu0 0.0
        %815 = vmatpush1.msra.mxu0 0.0
        %816 = vmatprep.subr.mxu0 0.0
        %817 = vmatpush1.msra.mxu0 0.0
        %818 = vmatprep.subr.mxu0 0.0
        %819 = vmatpush1.msra.mxu0 0.0
        %820 = vmatprep.subr.mxu0 0.0
        %821 = vmatpush1.msra.mxu0 0.0
        %822 = vmatprep.subr.mxu0 0.0
        %823 = vmatpush1.msra.mxu0 0.0
        %824 = vmatprep.subr.mxu0 0.0
        %825 = vmatpush1.msra.mxu0 0.0
        %826 = vmatprep.subr.mxu0 0.0
        %827 = vmatpush1.msra.mxu0 0.0
        %828 = vmatprep.subr.mxu0 0.0
        %829 = vmatpush1.msra.mxu0 0.0
        %830 = vmatprep.subr.mxu0 0.0
        %831 = vmatpush1.msra.mxu0 0.0
        %832 = vmatprep.subr.mxu0 0.0
        %833 = vmatpush1.msra.mxu0 0.0
        %834 = vmatprep.subr.mxu0 0.0
        %835 = vmatpush1.msra.mxu0 0.0
        %836 = vmatprep.subr.mxu0 0.0
        %837 = vmatpush1.msra.mxu0 0.0
        %838 = vmatprep.subr.mxu0 0.0
        %839 = vmatpush1.msra.mxu0 0.0
        %840 = vmatprep.subr.mxu0 0.0
        %841 = vmatpush1.msra.mxu0 0.0
        %842 = vmatprep.subr.mxu0 0.0
        %843 = vmatpush1.msra.mxu0 0.0
        %844 = vmatprep.subr.mxu0 0.0
        %845 = vmatpush1.msra.mxu0 0.0
        %846 = vmatprep.subr.mxu0 0.0
        %847 = vmatpush1.msra.mxu0 0.0
        %848 = vmatprep.subr.mxu0 0.0
        %849 = vmatpush1.msra.mxu0 0.0
        %850 = vmatprep.mubr.f32.mxu0 0.0
        %851 = vmatmul.mubr.f32.gmra.mrb[0].mxu0 %v784
        %v852 = vpop.f32.mrb[0].mxu0
        %v853 = vadd.f32 0.0, %v852
        %v854 = vpop.f32.mrb[0].mxu0
        %855 = vdwg.mxu0
        %v856 = vrcp.pop %v779
        %v857 = vmul.f32 %v853, %v856
        %859 = vrot.lane.b32.xlu0 %v857, 16
        %v860 = vpop.permute.xlu0 %859
        %vm862 = vcmask 195712
        %863 = vst.msk [vmem:[#allocation2] sm:$0xff] %vm862, %v860
        %864 = vrot.lane.b32.xlu0 %v329, 104
        %v865 = vpop.permute.xlu0 %864
        %866 = vrot.lane.b32.xlu0 %v338, 72
        %v867 = vpop.permute.xlu0 %866
        %v868 = vsel %vm357, %v865, 0
        %v870 = vsel %vm357, %v867, 0
        %872 = vmatprep.subr.mxu0 0.0
        %873 = vmatpush1.xpose.msra.mxu0 %v870
        %874 = vmatprep.subr.mxu0 0.0
        %875 = vmatpush1.xpose.msra.mxu0 0.0
        %876 = vmatprep.subr.mxu0 0.0
        %877 = vmatpush1.xpose.msra.mxu0 0.0
        %878 = vmatprep.subr.mxu0 0.0
        %879 = vmatpush1.xpose.msra.mxu0 0.0
        %880 = vmatprep.subr.mxu0 0.0
        %881 = vmatpush1.xpose.msra.mxu0 0.0
        %882 = vmatprep.subr.mxu0 0.0
        %883 = vmatpush1.xpose.msra.mxu0 0.0
        %884 = vmatprep.subr.mxu0 0.0
        %885 = vmatpush1.xpose.msra.mxu0 0.0
        %886 = vmatprep.subr.mxu0 0.0
        %887 = vmatpush1.xpose.msra.mxu0 0.0
        %888 = vmatprep.subr.mxu0 0.0
        %889 = vmatpush1.xpose.msra.mxu0 0.0
        %890 = vmatprep.subr.mxu0 0.0
        %891 = vmatpush1.xpose.msra.mxu0 0.0
        %892 = vmatprep.subr.mxu0 0.0
        %893 = vmatpush1.xpose.msra.mxu0 0.0
        %894 = vmatprep.subr.mxu0 0.0
        %895 = vmatpush1.xpose.msra.mxu0 0.0
        %896 = vmatprep.subr.mxu0 0.0
        %897 = vmatpush1.xpose.msra.mxu0 0.0
        %898 = vmatprep.subr.mxu0 0.0
        %899 = vmatpush1.xpose.msra.mxu0 0.0
        %900 = vmatprep.subr.mxu0 0.0
        %901 = vmatpush1.xpose.msra.mxu0 0.0
        %902 = vmatprep.subr.mxu0 0.0
        %903 = vmatpush1.xpose.msra.mxu0 0.0
        %904 = vmatprep.subr.mxu0 0.0
        %905 = vmatpush1.xpose.msra.mxu0 0.0
        %906 = vmatprep.subr.mxu0 0.0
        %907 = vmatpush1.xpose.msra.mxu0 0.0
        %908 = vmatprep.subr.mxu0 0.0
        %909 = vmatpush1.xpose.msra.mxu0 0.0
        %910 = vmatprep.subr.mxu0 0.0
        %911 = vmatpush1.xpose.msra.mxu0 0.0
        %912 = vmatprep.subr.mxu0 0.0
        %913 = vmatpush1.xpose.msra.mxu0 0.0
        %914 = vmatprep.subr.mxu0 0.0
        %915 = vmatpush1.xpose.msra.mxu0 0.0
        %916 = vmatprep.subr.mxu0 0.0
        %917 = vmatpush1.xpose.msra.mxu0 0.0
        %918 = vmatprep.subr.mxu0 0.0
        %919 = vmatpush1.xpose.msra.mxu0 0.0
        %920 = vmatprep.subr.mxu0 0.0
        %921 = vmatpush1.xpose.msra.mxu0 0.0
        %922 = vmatprep.subr.mxu0 0.0
        %923 = vmatpush1.xpose.msra.mxu0 0.0
        %924 = vmatprep.subr.mxu0 0.0
        %925 = vmatpush1.xpose.msra.mxu0 0.0
        %926 = vmatprep.subr.mxu0 0.0
        %927 = vmatpush1.xpose.msra.mxu0 0.0
        %928 = vmatprep.subr.mxu0 0.0
        %929 = vmatpush1.xpose.msra.mxu0 0.0
        %930 = vmatprep.subr.mxu0 0.0
        %931 = vmatpush1.xpose.msra.mxu0 0.0
        %932 = vmatprep.subr.mxu0 0.0
        %933 = vmatpush1.xpose.msra.mxu0 0.0
        %934 = vmatprep.subr.mxu0 0.0
        %935 = vmatpush1.xpose.msra.mxu0 0.0
        %936 = vmatprep.mubr.f32.mxu0 0.0
        %937 = vmatmul.mubr.f32.gmra.mrb[0].mxu0 %v868
        %v938 = vpop.f32.mrb[0].mxu0
        %v939 = vadd.f32 %v353, %v938
        %v940 = vpop.f32.mrb[0].mxu0
        %941 = vdwg.mxu0
        %v942 = vsel %vm357, %v939, -inf
        %943 = vmax.xlane.f32.xlu0 %v942
        %v944 = vpop.xlane.xlu0 %943
        %v945 = vsub.f32 %v939, %v944
        %v946 = vmul.f32 %v945, 1.442695
        %v947 = vpow.pop %v946
        %v948 = vsel %vm357, %v947, 0.0
        %949 = vadd.xlane.f32.xlu0 %v948
        %v950 = vpop.xlane.xlu0 %949
        %951 = vrot.lane.b32.xlu0 %v347, 40
        %v952 = vpop.permute.xlu0 %951
        %v955 = vsel %vm357, %v947, 0
        %957 = vmatprep.subr.mxu0 0.0
        %958 = vmatpush1.msra.mxu0 %v952
        %959 = vmatprep.subr.mxu0 0.0
        %960 = vmatpush1.msra.mxu0 0.0
        %961 = vmatprep.subr.mxu0 0.0
        %962 = vmatpush1.msra.mxu0 0.0
        %963 = vmatprep.subr.mxu0 0.0
        %964 = vmatpush1.msra.mxu0 0.0
        %965 = vmatprep.subr.mxu0 0.0
        %966 = vmatpush1.msra.mxu0 0.0
        %967 = vmatprep.subr.mxu0 0.0
        %968 = vmatpush1.msra.mxu0 0.0
        %969 = vmatprep.subr.mxu0 0.0
        %970 = vmatpush1.msra.mxu0 0.0
        %971 = vmatprep.subr.mxu0 0.0
        %972 = vmatpush1.msra.mxu0 0.0
        %973 = vmatprep.subr.mxu0 0.0
        %974 = vmatpush1.msra.mxu0 0.0
        %975 = vmatprep.subr.mxu0 0.0
        %976 = vmatpush1.msra.mxu0 0.0
        %977 = vmatprep.subr.mxu0 0.0
        %978 = vmatpush1.msra.mxu0 0.0
        %979 = vmatprep.subr.mxu0 0.0
        %980 = vmatpush1.msra.mxu0 0.0
        %981 = vmatprep.subr.mxu0 0.0
        %982 = vmatpush1.msra.mxu0 0.0
        %983 = vmatprep.subr.mxu0 0.0
        %984 = vmatpush1.msra.mxu0 0.0
        %985 = vmatprep.subr.mxu0 0.0
        %986 = vmatpush1.msra.mxu0 0.0
        %987 = vmatprep.subr.mxu0 0.0
        %988 = vmatpush1.msra.mxu0 0.0
        %989 = vmatprep.subr.mxu0 0.0
        %990 = vmatpush1.msra.mxu0 0.0
        %991 = vmatprep.subr.mxu0 0.0
        %992 = vmatpush1.msra.mxu0 0.0
        %993 = vmatprep.subr.mxu0 0.0
        %994 = vmatpush1.msra.mxu0 0.0
        %995 = vmatprep.subr.mxu0 0.0
        %996 = vmatpush1.msra.mxu0 0.0
        %997 = vmatprep.subr.mxu0 0.0
        %998 = vmatpush1.msra.mxu0 0.0
        %999 = vmatprep.subr.mxu0 0.0
        %1000 = vmatpush1.msra.mxu0 0.0
        %1001 = vmatprep.subr.mxu0 0.0
        %1002 = vmatpush1.msra.mxu0 0.0
        %1003 = vmatprep.subr.mxu0 0.0
        %1004 = vmatpush1.msra.mxu0 0.0
        %1005 = vmatprep.subr.mxu0 0.0
        %1006 = vmatpush1.msra.mxu0 0.0
        %1007 = vmatprep.subr.mxu0 0.0
        %1008 = vmatpush1.msra.mxu0 0.0
        %1009 = vmatprep.subr.mxu0 0.0
        %1010 = vmatpush1.msra.mxu0 0.0
        %1011 = vmatprep.subr.mxu0 0.0
        %1012 = vmatpush1.msra.mxu0 0.0
        %1013 = vmatprep.subr.mxu0 0.0
        %1014 = vmatpush1.msra.mxu0 0.0
        %1015 = vmatprep.subr.mxu0 0.0
        %1016 = vmatpush1.msra.mxu0 0.0
        %1017 = vmatprep.subr.mxu0 0.0
        %1018 = vmatpush1.msra.mxu0 0.0
        %1019 = vmatprep.subr.mxu0 0.0
        %1020 = vmatpush1.msra.mxu0 0.0
        %1021 = vmatprep.mubr.f32.mxu0 0.0
        %1022 = vmatmul.mubr.f32.gmra.mrb[0].mxu0 %v955
        %v1023 = vpop.f32.mrb[0].mxu0
        %v1024 = vadd.f32 0.0, %v1023
        %v1025 = vpop.f32.mrb[0].mxu0
        %1026 = vdwg.mxu0
        %v1027 = vrcp.pop %v950
        %v1028 = vmul.f32 %v1024, %v1027
        %1030 = vrot.lane.b32.xlu0 %v1028, 24
        %v1031 = vpop.permute.xlu0 %1030
        %vm1033 = vcmask 261312
        %1034 = vst.msk [vmem:[#allocation2] sm:$0xff] %vm1033, %v1031
        %v1035 = vld [vmem:[#allocation2] sm:$0xff]
        %v1036 = vld [vmem:[%s2] sm:$0xff]
        %v1037 = vld [vmem:[%s2 + $0x8] sm:$0xff]
        %v1038 = vld [vmem:[%s2 + $0x10] sm:$0xff]
        %v1039 = vld [vmem:[%s2 + $0x18] sm:$0xff]
        %v1040 = vlaneseq
        %v1041 = vshrl.u32 %v1040, 7
        %v1042 = vsub.s32 0, %v1041
        %v1043 = vrot.slane %v218, %v1042
        %v1045 = vsel %vm222, %v1035, 0
        %1047 = vmatprep.subr.mxu0 0.0
        %1048 = vmatpush1.msra.mxu0 %v1036
        %1049 = vmatprep.subr.mxu0 0.0
        %1050 = vmatpush1.msra.mxu0 %v1037
        %1051 = vmatprep.subr.mxu0 0.0
        %1052 = vmatpush1.msra.mxu0 %v1038
        %1053 = vmatprep.subr.mxu0 0.0
        %1054 = vmatpush1.msra.mxu0 %v1039
        %1055 = vmatprep.subr.mxu0 0.0
        %1056 = vmatpush1.msra.mxu0 0.0
        %1057 = vmatprep.subr.mxu0 0.0
        %1058 = vmatpush1.msra.mxu0 0.0
        %1059 = vmatprep.subr.mxu0 0.0
        %1060 = vmatpush1.msra.mxu0 0.0
        %1061 = vmatprep.subr.mxu0 0.0
        %1062 = vmatpush1.msra.mxu0 0.0
        %1063 = vmatprep.subr.mxu0 0.0
        %1064 = vmatpush1.msra.mxu0 0.0
        %1065 = vmatprep.subr.mxu0 0.0
        %1066 = vmatpush1.msra.mxu0 0.0
        %1067 = vmatprep.subr.mxu0 0.0
        %1068 = vmatpush1.msra.mxu0 0.0
        %1069 = vmatprep.subr.mxu0 0.0
        %1070 = vmatpush1.msra.mxu0 0.0
        %1071 = vmatprep.subr.mxu0 0.0
        %1072 = vmatpush1.msra.mxu0 0.0
        %1073 = vmatprep.subr.mxu0 0.0
        %1074 = vmatpush1.msra.mxu0 0.0
        %1075 = vmatprep.subr.mxu0 0.0
        %1076 = vmatpush1.msra.mxu0 0.0
        %1077 = vmatprep.subr.mxu0 0.0
        %1078 = vmatpush1.msra.mxu0 0.0
        %1079 = vmatprep.subr.mxu0 0.0
        %1080 = vmatpush1.msra.mxu0 0.0
        %1081 = vmatprep.subr.mxu0 0.0
        %1082 = vmatpush1.msra.mxu0 0.0
        %1083 = vmatprep.subr.mxu0 0.0
        %1084 = vmatpush1.msra.mxu0 0.0
        %1085 = vmatprep.subr.mxu0 0.0
        %1086 = vmatpush1.msra.mxu0 0.0
        %1087 = vmatprep.subr.mxu0 0.0
        %1088 = vmatpush1.msra.mxu0 0.0
        %1089 = vmatprep.subr.mxu0 0.0
        %1090 = vmatpush1.msra.mxu0 0.0
        %1091 = vmatprep.subr.mxu0 0.0
        %1092 = vmatpush1.msra.mxu0 0.0
        %1093 = vmatprep.subr.mxu0 0.0
        %1094 = vmatpush1.msra.mxu0 0.0
        %1095 = vmatprep.subr.mxu0 0.0
        %1096 = vmatpush1.msra.mxu0 0.0
        %1097 = vmatprep.subr.mxu0 0.0
        %1098 = vmatpush1.msra.mxu0 0.0
        %1099 = vmatprep.subr.mxu0 0.0
        %1100 = vmatpush1.msra.mxu0 0.0
        %1101 = vmatprep.subr.mxu0 0.0
        %1102 = vmatpush1.msra.mxu0 0.0
        %1103 = vmatprep.subr.mxu0 0.0
        %1104 = vmatpush1.msra.mxu0 0.0
        %1105 = vmatprep.subr.mxu0 0.0
        %1106 = vmatpush1.msra.mxu0 0.0
        %1107 = vmatprep.subr.mxu0 0.0
        %1108 = vmatpush1.msra.mxu0 0.0
        %1109 = vmatprep.subr.mxu0 0.0
        %1110 = vmatpush1.msra.mxu0 0.0
        %1111 = vmatprep.mubr.f32.mxu0 0.0
        %1112 = vmatmul.mubr.f32.gmra.mrb[0].mxu0 %v1045
        %v1113 = vpop.f32.mrb[0].mxu0
        %v1114 = vadd.f32 %v1043, %v1113
        %v1115 = vpop.f32.mrb[0].mxu0
        %1116 = vdwg.mxu0
        %v1117 = vadd.f32 %v1114, %v213
        %v1118 = vsel %vm222, %v1117, 0.0
        %1119 = vadd.xlane.f32.xlu0 %v1118
        %v1120 = vpop.xlane.xlu0 %1119
        %v1121 = vmul.f32 %v1120, %v226
        %v1122 = vsub.f32 %v1117, %v1121
        %v1123 = vmul.f32 %v1122, %v1122
        %v1124 = vsel %vm222, %v1123, 0.0
        %1125 = vadd.xlane.f32.xlu0 %v1124
        %v1126 = vpop.xlane.xlu0 %1125
        %v1127 = vmul.f32 %v1126, %v226
        %v1128 = vadd.f32 %v1127, 1e-05
        %v1129 = vrsqrt.pop %v1128
        %v1130 = vmul.f32 %v1122, %v1129
        %v1131 = vlaneseq
        %v1132 = vshrl.u32 %v1131, 7
        %v1133 = vsub.s32 0, %v1132
        %v1134 = vrot.slane %v216, %v1133
        %v1135 = vmul.f32 %v1130, %v1134
        %v1136 = vlaneseq
        %v1137 = vshrl.u32 %v1136, 7
        %v1138 = vsub.s32 0, %v1137
        %v1139 = vrot.slane %v217, %v1138
        %v1140 = vadd.f32 %v1135, %v1139
        %1141 = vst.msk [vmem:[%s212] sm:$0xff] %vm222, %v1140
        %s1142 = sand.u32 %s118, 1
        %s1143 = scalar_lea.sflag [#allocation5], %s1142
        %s1144 = sand.u32 %s118, 1
        %s1145 = smul.addr %s1144, 8
        %s1146 = scalar_lea.vmem [#allocation6], %s1145
        // Predicated region
        $region41: #{tiny_gpt2_block.1} parent=35 // pred_check
          %p1147 = pneg %p128
        $region42: #{tiny_gpt2_block.1} parent=35 // pred_check_branch
          %1149 = sbr.rel (%p1147) target = $region44
        $region43: #{tiny_gpt2_block.1} parent=35 // pred_region
          %s1151 = ssub.s32 128, 128
          %1152 = vsyncadd %s1143, %s1151
          %s1153 = smul.addr %s21, 128
          %s1154 = scalar_lea.hbm %s4, %s1153
          %s1156 = sshll.u32 %s1146, 4
          %s1157 = int_to_ptr.vmem [resolvable:$true] %s1156
          %1159 = dma.vmem_to_hbm [thread:$0]  %s1157, 128, %s1154, %s1143
        $region44: #{tiny_gpt2_block.1} parent=35 // pred_fallthru
          _
      $region36: #{tiny_gpt2_block.1} parent=5 // pred_fallthru
        _
      %p1160 = scmp.le.s32.totalorder 2, %s16
      // Predicated region
      $region45: #{tiny_gpt2_block.1} parent=5 // pred_check
        %p1161 = pneg %p1160
      $region46: #{tiny_gpt2_block.1} parent=5 // pred_check_branch
        %1163 = sbr.rel (%p1161) target = $region48
      $region47: #{tiny_gpt2_block.1} parent=5 // pred_region
        %s1164 = ssub.s32 %s16, 2
        // Predicated region
        $region49: #{tiny_gpt2_block.1} parent=47 // pred_check
          %p1165 = pneg %p134
        $region50: #{tiny_gpt2_block.1} parent=47 // pred_check_branch
          %1167 = sbr.rel (%p1165) target = $region52
        $region51: #{tiny_gpt2_block.1} parent=47 // pred_region
          %s1168 = sand.u32 %s119, 1
          %s1169 = scalar_lea.sflag [#allocation5], %s1168
          %s1170 = sand.u32 %s119, 1
          %s1171 = smul.addr %s1170, 8
          %s1172 = scalar_lea.vmem [#allocation6], %s1171
          %1173 = dma.done %s1169, 128
        $region52: #{tiny_gpt2_block.1} parent=47 // pred_fallthru
          _
      $region48: #{tiny_gpt2_block.1} parent=5 // pred_fallthru
        _
    $region6: #{tiny_gpt2_block.1} parent=1 // loop_footer
      %s20 = sadd.s32 1, %s16
    $region7: #{tiny_gpt2_block.1} parent=1 // loop_footer_branch
      %15 = sbr.rel target = $region3
    $region8: #{tiny_gpt2_block.1} parent=1 // loop_exit
      _
    %1174 = vsyncpa [#allocation4], 1
    %s1175 = scalar_lea.sflag [#allocation4], 1
    %1176 = vsyncpa %s1175, 1
    %1177 = vsyncpa [#allocation5], 1
    %s1178 = scalar_lea.sflag [#allocation5], 1
    %1179 = vsyncpa %s1178, 1

</llo_original>
